<compile_context>
chip_gen: v7x
topology: tpu7x:2x2x1
jax: 0.10.0
libtpu: 0.0.40
codegen_flags: <defaults>
</compile_context>

<pallas_src>
import functools

import numpy as np
import jax
import jax.numpy as jnp
from jax.experimental import pallas as pl
from jax.experimental.pallas import tpu as pltpu


# ----------------------------------------------------------------------------
# Cached structural constants (1-D bilinear, align_corners=True)
# ----------------------------------------------------------------------------
@functools.lru_cache(maxsize=None)
def _interp_matrix(out_size, in_size):
    """(out_size, in_size) 1-D bilinear interpolation matrix, align_corners=True."""
    a = np.zeros((out_size, in_size), np.float32)
    if in_size == 1:
        a[:, 0] = 1.0
        return a
    scale = (in_size - 1) / (out_size - 1)
    for o in range(out_size):
        src = o * scale
        lo = min(int(np.floor(src)), in_size - 2)
        fr = src - lo
        a[o, lo] += 1.0 - fr
        a[o, lo + 1] += fr
    return a


# ----------------------------------------------------------------------------
# Pallas kernel (closure over static shape info)
# ----------------------------------------------------------------------------
def _make_nlb_kernel(h, w, c):
    c2 = c // 2
    h4, w4 = h // 4, w // 4
    h8, w8 = h // 8, w // 8
    hwq = h * w4            # rows after W-direction pooling
    hw16 = h4 * w4          # rows after full 4x4 avg pooling
    hw64 = h8 * w8          # rows after extra 2x2 max pooling

    def kernel(x_ref, wtpg_ref, btpg_ref, zw_ref, zb_ref, ah_ref, aw_ref, o_ref):
        x = x_ref[0]                                          # (HW, C) f32

        # ---- down: 4x4/stride-4 avg pool (== fixed depthwise conv), separable:
        #      W direction then H, static slices + lane-preserving reshapes only.
        x4 = x.reshape(hwq, 4, c)
        xw = 0.25 * (x4[:, 0, :] + x4[:, 1, :] + x4[:, 2, :] + x4[:, 3, :])
        xw3 = xw.reshape(h4, w, c)
        xd3 = 0.25 * (xw3[:, 0 * w4:1 * w4, :] + xw3[:, 1 * w4:2 * w4, :]
                      + xw3[:, 2 * w4:3 * w4, :] + xw3[:, 3 * w4:4 * w4, :])
        xd = xd3.reshape(hw16, c).astype(jnp.bfloat16)        # (HW16, C)

        # ---- fused theta|phi|g 1x1 convs: single bf16 MXU matmul, f32 accum --
        tpg = jnp.dot(xd, wtpg_ref[...],
                      preferred_element_type=jnp.float32) + btpg_ref[...]   # (HW16, 3C2)
        theta = tpg[:, :c2]                                   # (HW16, C2)
        pg = tpg[:, c2:]                                      # phi|g kept fused (lane-dense)

        # ---- 2x2 max pool on the phi|g path (small tensor, static slices) ---
        pg3 = pg.reshape(hw16 // 2, 2, 2 * c2)
        m1 = jnp.maximum(pg3[:, 0, :], pg3[:, 1, :])          # pooled along W4
        m14 = m1.reshape(h8, 2, w8, 2 * c2)
        m2 = jnp.maximum(m14[:, 0, :, :], m14[:, 1, :, :])    # pooled along H4
        pgp = m2.reshape(hw64, 2 * c2)
        phi = pgp[:, :c2].astype(jnp.bfloat16)                # (HW64, C2)
        gmx = pgp[:, c2:].astype(jnp.bfloat16)                # (HW64, C2)

        # ---- attention: softmax(theta @ phi^T) @ g ----------------------------
        #      softmax in f32, temporaries overwritten in place, bf16 only as
        #      MXU operands (v5e has no bf16 VPU/EUP).
        scores = jax.lax.dot_general(
            theta.astype(jnp.bfloat16), phi, (((1,), (1,)), ((), ())),
            preferred_element_type=jnp.float32)               # (HW16, HW64) f32
        scores = jnp.exp(scores - jnp.max(scores, axis=-1, keepdims=True))
        f = (scores * pl.reciprocal(jnp.sum(scores, axis=-1, keepdims=True),
                                    approx=True)).astype(jnp.bfloat16)
        y = jnp.dot(f, gmx, preferred_element_type=jnp.float32)   # (HW16, C2)

        # ---- z 1x1 conv --------------------------------------------------------
        z = jnp.dot(y.astype(jnp.bfloat16), zw_ref[...],
                    preferred_element_type=jnp.float32) + zb_ref[...]   # (HW16, C)

        # ---- bilinear upsample (align_corners=True): two batched bf16 MXU
        #      matmuls (H-direction batched over W4, then W-direction batched
        #      over H). Intermediate leading-axis swaps use the lane-layout
        #      aware einshape; all tensors keep C as the lane dim.
        z3 = z.reshape(h4, w4, c)                             # (H4, W4, C), rows (p, q)
        z3q = pltpu.einshape("pqc->qpc", z3).astype(jnp.bfloat16)   # (W4, H4, C)
        ah_b = jnp.broadcast_to(ah_ref[...], (w4, h, h4))     # bf16 (W4, H, H4)
        t = jax.lax.dot_general(                              # (W4, H, C) f32
            ah_b, z3q, (((2,), (1,)), ((0,), (0,))),
            preferred_element_type=jnp.float32)
        th = pltpu.einshape("qhc->hqc", t).astype(jnp.bfloat16)     # (H, W4, C)
        aw_b = jnp.broadcast_to(aw_ref[...], (h, w, w4))      # bf16 (H, W, W4)
        up = jax.lax.dot_general(                             # (H, W, C) f32
            aw_b, th, (((2,), (1,)), ((0,), (0,))),
            preferred_element_type=jnp.float32)

        # ---- residual add + ONE lane-dense full-slab store --------------------
        o_ref[0] = (x_ref[0] + up.reshape(h * w, c)).astype(o_ref.dtype)

    return kernel


# ----------------------------------------------------------------------------
# Wrapper
# ----------------------------------------------------------------------------
def _vmem_capacity_bytes():
    try:
        cap = getattr(pltpu.get_tpu_info(), "vmem_capacity_bytes", None)
        if cap:
            return int(cap)
    except Exception:
        pass
    return 64 * 2 ** 20      # conservative fallback: v7x per-TensorCore VMEM


@jax.jit
def nlb_forward(x_nchw, params):
    n, c, h, w = x_nchw.shape
    assert c % 2 == 0 and h % 8 == 0 and w % 8 == 0, \
        "NLB kernel assumes C even and H, W multiples of 8 (4x avg pool + 2x max pool)"
    hw = h * w
    h4, w4 = h // 4, w // 4
    h8, w8 = h // 8, w // 8
    hw16, hw64 = h4 * w4, h8 * w8

    tw, tb, pw, pb, gw, gb, zw, zb = params

    # NCHW -> (N, HW, C) tokens x channels.
    # TODO(synk): keep NHWC end-to-end in the surrounding model to drop these
    # two full-HBM-pass transposes (they move more bytes than the kernel).
    x_flat = jnp.transpose(x_nchw, (0, 2, 3, 1)).reshape(n, hw, c)

    # 1x1-conv weights as bf16 MXU operands; biases stay f32.
    w_tpg = jnp.concatenate([tw, pw, gw], axis=1).astype(jnp.bfloat16)   # (C, 3*C/2)
    b_tpg = jnp.concatenate([tb, pb, gb], axis=1).astype(jnp.float32)    # (1, 3*C/2)
    zw_bf = zw.astype(jnp.bfloat16)                                      # (C/2, C)
    zb_f = zb.astype(jnp.float32)                                        # (1, C)
    # bilinear (align_corners=True) interpolation matrices, bf16 MXU operands.
    ah = jnp.asarray(_interp_matrix(h, h4)).astype(jnp.bfloat16)         # (H, H/4)
    aw = jnp.asarray(_interp_matrix(w, w4)).astype(jnp.bfloat16)         # (W, W/4)

    inputs = (x_flat, w_tpg, b_tpg, zw_bf, zb_f, ah, aw)

    def full_spec(arr):
        nd = arr.ndim
        return pl.BlockSpec(arr.shape, lambda b, _nd=nd: (0,) * _nd)

    in_specs = [pl.BlockSpec((1, hw, c), lambda b: (b, 0, 0))] + \
               [full_spec(a) for a in inputs[1:]]

    # VMEM budget: actual residents (double-buffered image blocks, quadratic
    # softmax temporaries, upsample intermediates and broadcast interp weights)
    # plus headroom, capped at 75% of physical VMEM (~48 MiB v7x, ~96 MiB v5e/v6e).
    block_bytes = hw * c * 4
    vmem_needed = (
        4 * block_bytes                       # in + out blocks, double-buffered
        + 3 * hw16 * hw64 * 4                 # scores / softmax / f temporaries
        + block_bytes                         # full-res f32 upsample result
        + 3 * hw * c                          # quarter-size pooled / interp temps
        + (w4 * h * h4 + h * w * w4) * 2      # broadcast bf16 interp operands
        + 16 * hw16 * c * 4                   # xd / theta|phi|g / y / z
        + 4 * 2 ** 20                         # headroom
    )
    cap = int(0.75 * _vmem_capacity_bytes())
    vmem_limit = int(max(16 * 2 ** 20, min(cap, vmem_needed)))

    # TODO(synk): for very large H*W on v7x (64 MiB VMEM) add a spatial
    # row-block grid axis for the pooling prologue and the upsample+residual
    # epilogue (pooled tensors in VMEM scratch, attention gated with pl.when)
    # instead of whole-image (1, HW, C) blocks; channel-pad C/2 -> 128 for the
    # attention operands at production channel counts.
    out = pl.pallas_call(
        _make_nlb_kernel(h, w, c),
        out_shape=jax.ShapeDtypeStruct((n, hw, c), jnp.float32),
        grid=(n,),
        in_specs=in_specs,
        out_specs=pl.BlockSpec((1, hw, c), lambda b: (b, 0, 0)),
        input_output_aliases={0: 0},          # x_flat is a transpose temp -> alias
        compiler_params=pltpu.CompilerParams(
            dimension_semantics=("parallel",),
            vmem_limit_bytes=vmem_limit),
    )(*inputs)

    return jnp.transpose(out.reshape(n, h, w, c), (0, 3, 1, 2))


# ----------------------------------------------------------------------------
# Pure-JAX reference (f32, same math as the PyTorch module)
# ----------------------------------------------------------------------------
def nlb_reference(x_nchw, params):
    n, c, h, w = x_nchw.shape
    c2 = c // 2
    h4, w4, h8, w8 = h // 4, w // 4, h // 8, w // 8
    tw, tb, pw, pb, gw, gb, zw, zb = params

    xd = x_nchw.reshape(n, c, h4, 4, w4, 4).mean(axis=(3, 5))            # 4x4 avg pool
    xdf = jnp.transpose(xd, (0, 2, 3, 1)).reshape(n, h4 * w4, c)
    theta = xdf @ tw + tb
    phi = (xdf @ pw + pb).reshape(n, h8, 2, w8, 2, c2).max(axis=(2, 4)).reshape(n, h8 * w8, c2)
    gm = (xdf @ gw + gb).reshape(n, h8, 2, w8, 2, c2).max(axis=(2, 4)).reshape(n, h8 * w8, c2)
    scores = jnp.einsum('npc,nqc->npq', theta, phi)
    f = jax.nn.softmax(scores, axis=-1)
    y = jnp.einsum('npq,nqc->npc', f, gm)
    z = (y @ zw + zb).reshape(n, h4, w4, c)
    ah = jnp.asarray(_interp_matrix(h, h4))
    aw = jnp.asarray(_interp_matrix(w, w4))
    up = jnp.einsum('hp,wq,npqc->nhwc', ah, aw, z)
    out = jnp.transpose(x_nchw, (0, 2, 3, 1)) + up
    return jnp.transpose(out, (0, 3, 1, 2))


if __name__ == "__main__":
    n, c, h, w = 2, 4, 16, 16
    c2 = c // 2

    key = jax.random.PRNGKey(0)
    ks = jax.random.split(key, 9)
    x = jax.random.normal(ks[0], (n, c, h, w), jnp.float32)

    # Deterministic synthetic parameters (1x1 conv weights stored as (Cin, Cout)).
    params = (
        0.2 * jax.random.normal(ks[1], (c, c2), jnp.float32),   # theta.weight^T
        0.1 * jax.random.normal(ks[2], (1, c2), jnp.float32),   # theta.bias
        0.2 * jax.random.normal(ks[3], (c, c2), jnp.float32),   # phi.weight^T
        0.1 * jax.random.normal(ks[4], (1, c2), jnp.float32),   # phi.bias
        0.2 * jax.random.normal(ks[5], (c, c2), jnp.float32),   # g.weight^T
        0.1 * jax.random.normal(ks[6], (1, c2), jnp.float32),   # g.bias
        0.2 * jax.random.normal(ks[7], (c2, c), jnp.float32),   # z.weight^T
        0.1 * jax.random.normal(ks[8], (1, c), jnp.float32),    # z.bias
    )

    out = jax.block_until_ready(nlb_forward(x, params))
    ref = jax.block_until_ready(nlb_reference(x, params))

    assert out.shape == (n, c, h, w)
    # bf16 MXU operands + approx reciprocal vs f32 reference -> slightly looser tolerance.
    assert np.allclose(np.asarray(out), np.asarray(ref), atol=2e-2, rtol=2e-2)
    print("KERNEL_OK")
</pallas_src>

<mosaic_0001>
module attributes {stable_mosaic.version = 11 : i64} {
  func.func @kernel(%arg0: i32, %arg1: memref<1x256x4xf32, #tpu.memory_space<vmem>>, %arg2: memref<4x6xbf16, #tpu.memory_space<vmem>>, %arg3: memref<1x6xf32, #tpu.memory_space<vmem>>, %arg4: memref<2x4xbf16, #tpu.memory_space<vmem>>, %arg5: memref<1x4xf32, #tpu.memory_space<vmem>>, %arg6: memref<16x4xbf16, #tpu.memory_space<vmem>>, %arg7: memref<16x4xbf16, #tpu.memory_space<vmem>>, %arg8: memref<1x256x4xf32, #tpu.memory_space<vmem>>) attributes {dimension_semantics = [#tpu.dimension_semantics<parallel>], iteration_bounds = array<i64: 2>, scalar_prefetch = 0 : i64, scratch_operands = 0 : i64, tpu.core_type = #tpu.core_type<tc>, window_params = [{transform_indices = @transform_0, window_bounds = array<i64: 1, 256, 4>}, {pipeline_mode = #tpu.pipeline_mode<synchronous>, transform_indices = @transform_1, window_bounds = array<i64: 4, 6>}, {pipeline_mode = #tpu.pipeline_mode<synchronous>, transform_indices = @transform_2, window_bounds = array<i64: 1, 6>}, {pipeline_mode = #tpu.pipeline_mode<synchronous>, transform_indices = @transform_3, window_bounds = array<i64: 2, 4>}, {pipeline_mode = #tpu.pipeline_mode<synchronous>, transform_indices = @transform_4, window_bounds = array<i64: 1, 4>}, {pipeline_mode = #tpu.pipeline_mode<synchronous>, transform_indices = @transform_5, window_bounds = array<i64: 16, 4>}, {pipeline_mode = #tpu.pipeline_mode<synchronous>, transform_indices = @transform_6, window_bounds = array<i64: 16, 4>}, {transform_indices = @transform_7, window_bounds = array<i64: 1, 256, 4>}]} {
    %c0 = arith.constant 0 : index
    %c0_0 = arith.constant 0 : index
    %c0_1 = arith.constant 0 : index
    %0 = vector.load %arg1[%c0, %c0_0, %c0_1] : memref<1x256x4xf32, #tpu.memory_space<vmem>>, vector<1x256x4xf32>
    %1 = vector.shape_cast %0 : vector<1x256x4xf32> to vector<256x4xf32>
    %2 = vector.shape_cast %1 : vector<256x4xf32> to vector<64x4x4xf32>
    %3 = vector.extract_strided_slice %2 {offsets = [0, 0, 0], sizes = [64, 1, 4], strides = [1, 1, 1]} : vector<64x4x4xf32> to vector<64x1x4xf32>
    %4 = vector.shape_cast %3 : vector<64x1x4xf32> to vector<64x4xf32>
    %5 = vector.extract_strided_slice %2 {offsets = [0, 1, 0], sizes = [64, 1, 4], strides = [1, 1, 1]} : vector<64x4x4xf32> to vector<64x1x4xf32>
    %6 = vector.shape_cast %5 : vector<64x1x4xf32> to vector<64x4xf32>
    %7 = arith.addf %4, %6 : vector<64x4xf32>
    %8 = vector.extract_strided_slice %2 {offsets = [0, 2, 0], sizes = [64, 1, 4], strides = [1, 1, 1]} : vector<64x4x4xf32> to vector<64x1x4xf32>
    %9 = vector.shape_cast %8 : vector<64x1x4xf32> to vector<64x4xf32>
    %10 = arith.addf %7, %9 : vector<64x4xf32>
    %11 = vector.extract_strided_slice %2 {offsets = [0, 3, 0], sizes = [64, 1, 4], strides = [1, 1, 1]} : vector<64x4x4xf32> to vector<64x1x4xf32>
    %12 = vector.shape_cast %11 : vector<64x1x4xf32> to vector<64x4xf32>
    %13 = arith.addf %10, %12 : vector<64x4xf32>
    %cst = arith.constant 2.500000e-01 : f32
    %14 = vector.broadcast %cst : f32 to vector<64x4xf32>
    %15 = arith.mulf %14, %13 : vector<64x4xf32>
    %16 = vector.shape_cast %15 : vector<64x4xf32> to vector<4x16x4xf32>
    %17 = vector.extract_strided_slice %16 {offsets = [0, 0, 0], sizes = [4, 4, 4], strides = [1, 1, 1]} : vector<4x16x4xf32> to vector<4x4x4xf32>
    %18 = vector.extract_strided_slice %16 {offsets = [0, 4, 0], sizes = [4, 4, 4], strides = [1, 1, 1]} : vector<4x16x4xf32> to vector<4x4x4xf32>
    %19 = arith.addf %17, %18 : vector<4x4x4xf32>
    %20 = vector.extract_strided_slice %16 {offsets = [0, 8, 0], sizes = [4, 4, 4], strides = [1, 1, 1]} : vector<4x16x4xf32> to vector<4x4x4xf32>
    %21 = arith.addf %19, %20 : vector<4x4x4xf32>
    %22 = vector.extract_strided_slice %16 {offsets = [0, 12, 0], sizes = [4, 4, 4], strides = [1, 1, 1]} : vector<4x16x4xf32> to vector<4x4x4xf32>
    %23 = arith.addf %21, %22 : vector<4x4x4xf32>
    %cst_2 = arith.constant 2.500000e-01 : f32
    %24 = vector.broadcast %cst_2 : f32 to vector<4x4x4xf32>
    %25 = arith.mulf %24, %23 : vector<4x4x4xf32>
    %26 = vector.shape_cast %25 : vector<4x4x4xf32> to vector<16x4xf32>
    %27 = arith.truncf %26 : vector<16x4xf32> to vector<16x4xbf16>
    %c0_3 = arith.constant 0 : index
    %c0_4 = arith.constant 0 : index
    %28 = vector.load %arg2[%c0_3, %c0_4] : memref<4x6xbf16, #tpu.memory_space<vmem>>, vector<4x6xbf16>
    %cst_5 = arith.constant dense<0.000000e+00> : vector<16x6xf32>
    %29 = tpu.matmul %27, %28, %cst_5 {dimension_numbers = #tpu.dot_dimension_numbers<[1], [0], [0], [1], [0, 0, 1, 1], [], []>} : vector<16x4xbf16>, vector<4x6xbf16>, vector<16x6xf32> -> vector<16x6xf32>
    %c0_6 = arith.constant 0 : index
    %c0_7 = arith.constant 0 : index
    %30 = vector.load %arg3[%c0_6, %c0_7] : memref<1x6xf32, #tpu.memory_space<vmem>>, vector<1x6xf32>
    %31 = vector.broadcast %30 : vector<1x6xf32> to vector<16x6xf32>
    %32 = arith.addf %29, %31 : vector<16x6xf32>
    %33 = vector.extract_strided_slice %32 {offsets = [0, 0], sizes = [16, 2], strides = [1, 1]} : vector<16x6xf32> to vector<16x2xf32>
    %34 = vector.extract_strided_slice %32 {offsets = [0, 2], sizes = [16, 4], strides = [1, 1]} : vector<16x6xf32> to vector<16x4xf32>
    %35 = vector.shape_cast %34 : vector<16x4xf32> to vector<8x2x4xf32>
    %36 = vector.extract_strided_slice %35 {offsets = [0, 0, 0], sizes = [8, 1, 4], strides = [1, 1, 1]} : vector<8x2x4xf32> to vector<8x1x4xf32>
    %37 = vector.shape_cast %36 : vector<8x1x4xf32> to vector<8x4xf32>
    %38 = vector.extract_strided_slice %35 {offsets = [0, 1, 0], sizes = [8, 1, 4], strides = [1, 1, 1]} : vector<8x2x4xf32> to vector<8x1x4xf32>
    %39 = vector.shape_cast %38 : vector<8x1x4xf32> to vector<8x4xf32>
    %40 = arith.maximumf %37, %39 : vector<8x4xf32>
    %41 = vector.shape_cast %40 : vector<8x4xf32> to vector<2x2x2x4xf32>
    %42 = vector.extract_strided_slice %41 {offsets = [0, 0, 0, 0], sizes = [2, 1, 2, 4], strides = [1, 1, 1, 1]} : vector<2x2x2x4xf32> to vector<2x1x2x4xf32>
    %43 = vector.shape_cast %42 : vector<2x1x2x4xf32> to vector<2x2x4xf32>
    %44 = vector.extract_strided_slice %41 {offsets = [0, 1, 0, 0], sizes = [2, 1, 2, 4], strides = [1, 1, 1, 1]} : vector<2x2x2x4xf32> to vector<2x1x2x4xf32>
    %45 = vector.shape_cast %44 : vector<2x1x2x4xf32> to vector<2x2x4xf32>
    %46 = arith.maximumf %43, %45 : vector<2x2x4xf32>
    %47 = vector.shape_cast %46 : vector<2x2x4xf32> to vector<4x4xf32>
    %48 = vector.extract_strided_slice %47 {offsets = [0, 0], sizes = [4, 2], strides = [1, 1]} : vector<4x4xf32> to vector<4x2xf32>
    %49 = arith.truncf %48 : vector<4x2xf32> to vector<4x2xbf16>
    %50 = vector.extract_strided_slice %47 {offsets = [0, 2], sizes = [4, 2], strides = [1, 1]} : vector<4x4xf32> to vector<4x2xf32>
    %51 = arith.truncf %50 : vector<4x2xf32> to vector<4x2xbf16>
    %52 = arith.truncf %33 : vector<16x2xf32> to vector<16x2xbf16>
    %cst_8 = arith.constant dense<0.000000e+00> : vector<16x4xf32>
    %53 = tpu.matmul %52, %49, %cst_8 {dimension_numbers = #tpu.dot_dimension_numbers<[1], [1], [0], [0], [0, 0, 1, 0], [], []>} : vector<16x2xbf16>, vector<4x2xbf16>, vector<16x4xf32> -> vector<16x4xf32>
    %cst_9 = arith.constant dense<0xFF800000> : vector<16xf32>
    %54 = vector.multi_reduction <maximumf>, %53, %cst_9 [1] : vector<16x4xf32> to vector<16xf32>
    %55 = vector.shape_cast %54 : vector<16xf32> to vector<16x1xf32>
    %56 = vector.broadcast %55 : vector<16x1xf32> to vector<16x4xf32>
    %57 = arith.subf %53, %56 : vector<16x4xf32>
    %58 = math.exp %57 : vector<16x4xf32>
    %cst_10 = arith.constant dense<0.000000e+00> : vector<16xf32>
    %59 = vector.multi_reduction <add>, %58, %cst_10 [1] : vector<16x4xf32> to vector<16xf32>
    %60 = vector.shape_cast %59 : vector<16xf32> to vector<16x1xf32>
    %61 = tpu.reciprocal %60 {approx = true} : vector<16x1xf32> -> vector<16x1xf32>
    %62 = vector.broadcast %61 : vector<16x1xf32> to vector<16x4xf32>
    %63 = arith.mulf %58, %62 : vector<16x4xf32>
    %64 = arith.truncf %63 : vector<16x4xf32> to vector<16x4xbf16>
    %cst_11 = arith.constant dense<0.000000e+00> : vector<16x2xf32>
    %65 = tpu.matmul %64, %51, %cst_11 {dimension_numbers = #tpu.dot_dimension_numbers<[1], [0], [0], [1], [0, 0, 1, 1], [], []>} : vector<16x4xbf16>, vector<4x2xbf16>, vector<16x2xf32> -> vector<16x2xf32>
    %66 = arith.truncf %65 : vector<16x2xf32> to vector<16x2xbf16>
    %c0_12 = arith.constant 0 : index
    %c0_13 = arith.constant 0 : index
    %67 = vector.load %arg4[%c0_12, %c0_13] : memref<2x4xbf16, #tpu.memory_space<vmem>>, vector<2x4xbf16>
    %cst_14 = arith.constant dense<0.000000e+00> : vector<16x4xf32>
    %68 = tpu.matmul %66, %67, %cst_14 {dimension_numbers = #tpu.dot_dimension_numbers<[1], [0], [0], [1], [0, 0, 1, 1], [], []>} : vector<16x2xbf16>, vector<2x4xbf16>, vector<16x4xf32> -> vector<16x4xf32>
    %c0_15 = arith.constant 0 : index
    %c0_16 = arith.constant 0 : index
    %69 = vector.load %arg5[%c0_15, %c0_16] : memref<1x4xf32, #tpu.memory_space<vmem>>, vector<1x4xf32>
    %70 = vector.broadcast %69 : vector<1x4xf32> to vector<16x4xf32>
    %71 = arith.addf %68, %70 : vector<16x4xf32>
    %72 = vector.shape_cast %71 : vector<16x4xf32> to vector<4x4x4xf32>
    %73 = tpu.transpose %72, [1, 0, 2] : vector<4x4x4xf32> -> vector<4x4x4xf32>
    %74 = arith.truncf %73 : vector<4x4x4xf32> to vector<4x4x4xbf16>
    %c0_17 = arith.constant 0 : index
    %c0_18 = arith.constant 0 : index
    %75 = vector.load %arg6[%c0_17, %c0_18] : memref<16x4xbf16, #tpu.memory_space<vmem>>, vector<16x4xbf16>
    %76 = vector.shape_cast %75 : vector<16x4xbf16> to vector<1x16x4xbf16>
    %77 = vector.broadcast %76 : vector<1x16x4xbf16> to vector<4x16x4xbf16>
    %cst_19 = arith.constant dense<0.000000e+00> : vector<4x16x4xf32>
    %78 = tpu.matmul %77, %74, %cst_19 {dimension_numbers = #tpu.dot_dimension_numbers<[2], [1], [1], [2], [0, 0, 0, 1, 1, 2], [0], [0]>} : vector<4x16x4xbf16>, vector<4x4x4xbf16>, vector<4x16x4xf32> -> vector<4x16x4xf32>
    %79 = tpu.transpose %78, [1, 0, 2] : vector<4x16x4xf32> -> vector<16x4x4xf32>
    %80 = arith.truncf %79 : vector<16x4x4xf32> to vector<16x4x4xbf16>
    %c0_20 = arith.constant 0 : index
    %c0_21 = arith.constant 0 : index
    %81 = vector.load %arg7[%c0_20, %c0_21] : memref<16x4xbf16, #tpu.memory_space<vmem>>, vector<16x4xbf16>
    %82 = vector.shape_cast %81 : vector<16x4xbf16> to vector<1x16x4xbf16>
    %83 = vector.broadcast %82 : vector<1x16x4xbf16> to vector<16x16x4xbf16>
    %cst_22 = arith.constant dense<0.000000e+00> : vector<16x16x4xf32>
    %84 = tpu.matmul %83, %80, %cst_22 {dimension_numbers = #tpu.dot_dimension_numbers<[2], [1], [1], [2], [0, 0, 0, 1, 1, 2], [0], [0]>} : vector<16x16x4xbf16>, vector<16x4x4xbf16>, vector<16x16x4xf32> -> vector<16x16x4xf32>
    %c0_23 = arith.constant 0 : index
    %c0_24 = arith.constant 0 : index
    %c0_25 = arith.constant 0 : index
    %85 = vector.load %arg1[%c0_23, %c0_24, %c0_25] : memref<1x256x4xf32, #tpu.memory_space<vmem>>, vector<1x256x4xf32>
    %86 = vector.shape_cast %85 : vector<1x256x4xf32> to vector<256x4xf32>
    %87 = vector.shape_cast %84 : vector<16x16x4xf32> to vector<256x4xf32>
    %88 = arith.addf %86, %87 : vector<256x4xf32>
    %c0_26 = arith.constant 0 : index
    %c0_27 = arith.constant 0 : index
    %c0_28 = arith.constant 0 : index
    %89 = vector.load %arg8[%c0_26, %c0_27, %c0_28] : memref<1x256x4xf32, #tpu.memory_space<vmem>>, vector<1x256x4xf32>
    %90 = vector.shape_cast %89 : vector<1x256x4xf32> to vector<256x4xf32>
    %91 = vector.shape_cast %88 : vector<256x4xf32> to vector<1x256x4xf32>
    tpu.vector_store %arg8[%c0_26, %c0_27, %c0_28], %91 {strides = array<i32>} : memref<1x256x4xf32, #tpu.memory_space<vmem>>, vector<1x256x4xf32>,
    return
  }
  func.func @transform_0(%arg0: i32) -> (i32, i32, i32) {
    %c0_i32 = arith.constant 0 : i32
    %c0_i32_0 = arith.constant 0 : i32
    %c0_i32_1 = arith.constant 0 : i32
    return %arg0, %c0_i32, %c0_i32_0 : i32, i32, i32
  }
  func.func @transform_1(%arg0: i32) -> (i32, i32) {
    %c0_i32 = arith.constant 0 : i32
    %c0_i32_0 = arith.constant 0 : i32
    %c0_i32_1 = arith.constant 0 : i32
    return %c0_i32, %c0_i32_0 : i32, i32
  }
  func.func @transform_2(%arg0: i32) -> (i32, i32) {
    %c0_i32 = arith.constant 0 : i32
    %c0_i32_0 = arith.constant 0 : i32
    %c0_i32_1 = arith.constant 0 : i32
    return %c0_i32, %c0_i32_0 : i32, i32
  }
  func.func @transform_3(%arg0: i32) -> (i32, i32) {
    %c0_i32 = arith.constant 0 : i32
    %c0_i32_0 = arith.constant 0 : i32
    %c0_i32_1 = arith.constant 0 : i32
    return %c0_i32, %c0_i32_0 : i32, i32
  }
  func.func @transform_4(%arg0: i32) -> (i32, i32) {
    %c0_i32 = arith.constant 0 : i32
    %c0_i32_0 = arith.constant 0 : i32
    %c0_i32_1 = arith.constant 0 : i32
    return %c0_i32, %c0_i32_0 : i32, i32
  }
  func.func @transform_5(%arg0: i32) -> (i32, i32) {
    %c0_i32 = arith.constant 0 : i32
    %c0_i32_0 = arith.constant 0 : i32
    %c0_i32_1 = arith.constant 0 : i32
    return %c0_i32, %c0_i32_0 : i32, i32
  }
  func.func @transform_6(%arg0: i32) -> (i32, i32) {
    %c0_i32 = arith.constant 0 : i32
    %c0_i32_0 = arith.constant 0 : i32
    %c0_i32_1 = arith.constant 0 : i32
    return %c0_i32, %c0_i32_0 : i32, i32
  }
  func.func @transform_7(%arg0: i32) -> (i32, i32, i32) {
    %c0_i32 = arith.constant 0 : i32
    %c0_i32_0 = arith.constant 0 : i32
    %c0_i32_1 = arith.constant 0 : i32
    return %arg0, %c0_i32, %c0_i32_0 : i32, i32, i32
  }
}

</mosaic_0001>

<llo_original>
// kernel: nlb_forward.1
$region0: #{nlb_forward.1}
  #allocation0 [shape = 'u32[]', space=smem, size = 0x4, offset = 0x4, fixed_abs, tag = 'smem constant byte address 0x4 - core index']
  #allocation1 [shape = 'u32[144,128]{1,0:T(1,128)}', space=vmem, size = 0x12000, scoped, tag = 'internal scratch']
  %s0 = inlined_call_operand.vmem [shape: f32[2,256,4], index: 0, kind: input, shape index: {}, may-alias: {0,7}]
  %s1 = inlined_call_operand.vmem [shape: bf16[4,6], index: 1, kind: input, shape index: {}]
  %s2 = inlined_call_operand.vmem [shape: f32[1,6], index: 2, kind: input, shape index: {}]
  %s3 = inlined_call_operand.vmem [shape: bf16[2,4], index: 3, kind: input, shape index: {}]
  %s4 = inlined_call_operand.vmem [shape: f32[1,4], index: 4, kind: input, shape index: {}]
  %s5 = inlined_call_operand.vmem [shape: bf16[16,4], index: 5, kind: input, shape index: {}, may-alias: {5,6}]
  %s6 = inlined_call_operand.vmem [shape: bf16[16,4], index: 6, kind: input, shape index: {}, may-alias: {5,6}]
  %s7 = inlined_call_operand.vmem [shape: f32[2,256,4], index: 7, kind: output, shape index: {}, may-alias: {0,7}]
  %s8 = sld [smem:[#allocation0]]
  $region61: #{nlb_forward.1} parent=0
    _
  %s10 = ssub.s32 1, %s8
  %s11 = scalar_select 0, %s10, %s8
  loop: start=0, step=1, limit=4
  $region2: #{nlb_forward.1} parent=0 // loop_pre_header
    _
  $region3: #{nlb_forward.1} parent=0 // loop_header
    %s13 = sphi 0, %s17
    %p14 = scmp.ge.s32.totalorder %s13, 4
    %s23 = sphi 0, %s25
    %s26 = sphi 0, %s23
    %s27 = sphi 0, %s26
    %s43 = sphi 0, %s27
    %s47 = sphi 0, %s47
    %s49 = sphi 0, %s47
    %s50 = sphi 0, %s49
    %s64 = sphi 0, %s50
    %s68 = sphi 0, %s68
    %s70 = sphi 0, %s68
    %s71 = sphi 0, %s70
    %s85 = sphi 0, %s71
    %s89 = sphi 0, %s89
    %s91 = sphi 0, %s89
    %s92 = sphi 0, %s91
    %s106 = sphi 0, %s92
    %s110 = sphi 0, %s110
    %s112 = sphi 0, %s110
    %s113 = sphi 0, %s112
    %s127 = sphi 0, %s113
    %s131 = sphi 0, %s131
    %s133 = sphi 0, %s131
    %s134 = sphi 0, %s133
    %s148 = sphi 0, %s134
    %s152 = sphi 0, %s152
    %s154 = sphi 0, %s152
    %s155 = sphi 0, %s154
    %s169 = sphi 0, %s155
    %s175 = sphi 0, %s177
    %s178 = sphi 0, %s175
    %s179 = sphi 0, %s178
    %s195 = sphi 0, %s179
  $region4: #{nlb_forward.1} parent=0 // loop_header_branch
    %16 = sbr.rel (%p14) target = $region8
  $region5: #{nlb_forward.1} parent=0 // loop_body
    %s18 = ssub.s32 %s13, 1
    %s19 = ssub.s32 %s13, 2
    %s20 = sadd.s32 %s13, 1
    %s21 = ssub.s32 %s13, %s20
    %p22 = scmp.eq.s32.totalorder %s21, 0
    %s24 = sadd.s32 %s23, 1
    %s25 = scalar_select %p22, %s23, %s24
    %p28 = pneg %p22
    %p29 = scmp.eq.s32.totalorder %s13, 1
    %p30 = por %p28, %p29
    %p31 = scmp.ne.s32.totalorder %s23, %s26
    %p32 = scmp.eq.s32.totalorder %s13, 0
    %p33 = por %p31, %p32
    %p34 = scmp.ne.s32.totalorder %s23, %s26
    %p35 = scmp.eq.s32.totalorder %s18, 1
    %p36 = por %p34, %p35
    %p37 = scmp.ne.s32.totalorder %s26, %s27
    %p38 = scmp.eq.s32.totalorder %s18, 0
    %p39 = por %p37, %p38
    %p40 = scmp.ne.s32.totalorder %s26, %s27
    %p41 = scmp.eq.s32.totalorder %s19, 1
    %p42 = por %p40, %p41
    %p44 = scmp.ne.s32.totalorder %s27, %s43
    %p45 = scmp.eq.s32.totalorder %s19, 0
    %p46 = por %p44, %p45
    %s48 = sadd.s32 %s47, 1
    %p51 = scmp.eq.s32.totalorder %s13, 1
    %p52 = scmp.ne.s32.totalorder %s47, %s49
    %p53 = scmp.eq.s32.totalorder %s13, 0
    %p54 = por %p52, %p53
    %p55 = scmp.ne.s32.totalorder %s47, %s49
    %p56 = scmp.eq.s32.totalorder %s18, 1
    %p57 = por %p55, %p56
    %p58 = scmp.ne.s32.totalorder %s49, %s50
    %p59 = scmp.eq.s32.totalorder %s18, 0
    %p60 = por %p58, %p59
    %p61 = scmp.ne.s32.totalorder %s49, %s50
    %p62 = scmp.eq.s32.totalorder %s19, 1
    %p63 = por %p61, %p62
    %p65 = scmp.ne.s32.totalorder %s50, %s64
    %p66 = scmp.eq.s32.totalorder %s19, 0
    %p67 = por %p65, %p66
    %s69 = sadd.s32 %s68, 1
    %p72 = scmp.eq.s32.totalorder %s13, 1
    %p73 = scmp.ne.s32.totalorder %s68, %s70
    %p74 = scmp.eq.s32.totalorder %s13, 0
    %p75 = por %p73, %p74
    %p76 = scmp.ne.s32.totalorder %s68, %s70
    %p77 = scmp.eq.s32.totalorder %s18, 1
    %p78 = por %p76, %p77
    %p79 = scmp.ne.s32.totalorder %s70, %s71
    %p80 = scmp.eq.s32.totalorder %s18, 0
    %p81 = por %p79, %p80
    %p82 = scmp.ne.s32.totalorder %s70, %s71
    %p83 = scmp.eq.s32.totalorder %s19, 1
    %p84 = por %p82, %p83
    %p86 = scmp.ne.s32.totalorder %s71, %s85
    %p87 = scmp.eq.s32.totalorder %s19, 0
    %p88 = por %p86, %p87
    %s90 = sadd.s32 %s89, 1
    %p93 = scmp.eq.s32.totalorder %s13, 1
    %p94 = scmp.ne.s32.totalorder %s89, %s91
    %p95 = scmp.eq.s32.totalorder %s13, 0
    %p96 = por %p94, %p95
    %p97 = scmp.ne.s32.totalorder %s89, %s91
    %p98 = scmp.eq.s32.totalorder %s18, 1
    %p99 = por %p97, %p98
    %p100 = scmp.ne.s32.totalorder %s91, %s92
    %p101 = scmp.eq.s32.totalorder %s18, 0
    %p102 = por %p100, %p101
    %p103 = scmp.ne.s32.totalorder %s91, %s92
    %p104 = scmp.eq.s32.totalorder %s19, 1
    %p105 = por %p103, %p104
    %p107 = scmp.ne.s32.totalorder %s92, %s106
    %p108 = scmp.eq.s32.totalorder %s19, 0
    %p109 = por %p107, %p108
    %s111 = sadd.s32 %s110, 1
    %p114 = scmp.eq.s32.totalorder %s13, 1
    %p115 = scmp.ne.s32.totalorder %s110, %s112
    %p116 = scmp.eq.s32.totalorder %s13, 0
    %p117 = por %p115, %p116
    %p118 = scmp.ne.s32.totalorder %s110, %s112
    %p119 = scmp.eq.s32.totalorder %s18, 1
    %p120 = por %p118, %p119
    %p121 = scmp.ne.s32.totalorder %s112, %s113
    %p122 = scmp.eq.s32.totalorder %s18, 0
    %p123 = por %p121, %p122
    %p124 = scmp.ne.s32.totalorder %s112, %s113
    %p125 = scmp.eq.s32.totalorder %s19, 1
    %p126 = por %p124, %p125
    %p128 = scmp.ne.s32.totalorder %s113, %s127
    %p129 = scmp.eq.s32.totalorder %s19, 0
    %p130 = por %p128, %p129
    %s132 = sadd.s32 %s131, 1
    %p135 = scmp.eq.s32.totalorder %s13, 1
    %p136 = scmp.ne.s32.totalorder %s131, %s133
    %p137 = scmp.eq.s32.totalorder %s13, 0
    %p138 = por %p136, %p137
    %p139 = scmp.ne.s32.totalorder %s131, %s133
    %p140 = scmp.eq.s32.totalorder %s18, 1
    %p141 = por %p139, %p140
    %p142 = scmp.ne.s32.totalorder %s133, %s134
    %p143 = scmp.eq.s32.totalorder %s18, 0
    %p144 = por %p142, %p143
    %p145 = scmp.ne.s32.totalorder %s133, %s134
    %p146 = scmp.eq.s32.totalorder %s19, 1
    %p147 = por %p145, %p146
    %p149 = scmp.ne.s32.totalorder %s134, %s148
    %p150 = scmp.eq.s32.totalorder %s19, 0
    %p151 = por %p149, %p150
    %s153 = sadd.s32 %s152, 1
    %p156 = scmp.eq.s32.totalorder %s13, 1
    %p157 = scmp.ne.s32.totalorder %s152, %s154
    %p158 = scmp.eq.s32.totalorder %s13, 0
    %p159 = por %p157, %p158
    %p160 = scmp.ne.s32.totalorder %s152, %s154
    %p161 = scmp.eq.s32.totalorder %s18, 1
    %p162 = por %p160, %p161
    %p163 = scmp.ne.s32.totalorder %s154, %s155
    %p164 = scmp.eq.s32.totalorder %s18, 0
    %p165 = por %p163, %p164
    %p166 = scmp.ne.s32.totalorder %s154, %s155
    %p167 = scmp.eq.s32.totalorder %s19, 1
    %p168 = por %p166, %p167
    %p170 = scmp.ne.s32.totalorder %s155, %s169
    %p171 = scmp.eq.s32.totalorder %s19, 0
    %p172 = por %p170, %p171
    %s173 = ssub.s32 %s13, %s20
    %p174 = scmp.eq.s32.totalorder %s173, 0
    %s176 = sadd.s32 %s175, 1
    %s177 = scalar_select %p174, %s175, %s176
    %p180 = pneg %p174
    %p181 = scmp.eq.s32.totalorder %s13, 1
    %p182 = por %p180, %p181
    %p183 = scmp.ne.s32.totalorder %s175, %s178
    %p184 = scmp.eq.s32.totalorder %s13, 0
    %p185 = por %p183, %p184
    %p186 = scmp.ne.s32.totalorder %s175, %s178
    %p187 = scmp.eq.s32.totalorder %s18, 1
    %p188 = por %p186, %p187
    %p189 = scmp.ne.s32.totalorder %s178, %s179
    %p190 = scmp.eq.s32.totalorder %s18, 0
    %p191 = por %p189, %p190
    %p192 = scmp.ne.s32.totalorder %s178, %s179
    %p193 = scmp.eq.s32.totalorder %s19, 1
    %p194 = por %p192, %p193
    %p196 = scmp.ne.s32.totalorder %s179, %s195
    %p197 = scmp.eq.s32.totalorder %s19, 0
    %p198 = por %p196, %p197
    %p199 = scmp.le.s32.totalorder 1, %s13
    %p200 = scmp.lt.s32.totalorder %s13, 3
    %p201 = pnand %p199, %p200
    %p202 = pneg %p201
    // Predicated region
    $region9: #{nlb_forward.1} parent=5 // pred_check
      _
    $region10: #{nlb_forward.1} parent=5 // pred_check_branch
      %204 = sbr.rel (%p201) target = $region12
    $region11: #{nlb_forward.1} parent=5 // pred_region
      %s205 = ssub.s32 %s13, 1
      // Predicated region
      $region13: #{nlb_forward.1} parent=11 // pred_check
        %p206 = pneg %p60
      $region14: #{nlb_forward.1} parent=11 // pred_check_branch
        %208 = sbr.rel (%p206) target = $region16
      $region15: #{nlb_forward.1} parent=11 // pred_region
        _
      $region16: #{nlb_forward.1} parent=11 // pred_fallthru
        _
      // Predicated region
      $region17: #{nlb_forward.1} parent=11 // pred_check
        %p209 = pneg %p81
      $region18: #{nlb_forward.1} parent=11 // pred_check_branch
        %211 = sbr.rel (%p209) target = $region20
      $region19: #{nlb_forward.1} parent=11 // pred_region
        _
      $region20: #{nlb_forward.1} parent=11 // pred_fallthru
        _
      // Predicated region
      $region21: #{nlb_forward.1} parent=11 // pred_check
        %p212 = pneg %p102
      $region22: #{nlb_forward.1} parent=11 // pred_check_branch
        %214 = sbr.rel (%p212) target = $region24
      $region23: #{nlb_forward.1} parent=11 // pred_region
        _
      $region24: #{nlb_forward.1} parent=11 // pred_fallthru
        _
      // Predicated region
      $region25: #{nlb_forward.1} parent=11 // pred_check
        %p215 = pneg %p123
      $region26: #{nlb_forward.1} parent=11 // pred_check_branch
        %217 = sbr.rel (%p215) target = $region28
      $region27: #{nlb_forward.1} parent=11 // pred_region
        _
      $region28: #{nlb_forward.1} parent=11 // pred_fallthru
        _
      // Predicated region
      $region29: #{nlb_forward.1} parent=11 // pred_check
        %p218 = pneg %p144
      $region30: #{nlb_forward.1} parent=11 // pred_check_branch
        %220 = sbr.rel (%p218) target = $region32
      $region31: #{nlb_forward.1} parent=11 // pred_region
        _
      $region32: #{nlb_forward.1} parent=11 // pred_fallthru
        _
      // Predicated region
      $region33: #{nlb_forward.1} parent=11 // pred_check
        %p221 = pneg %p165
      $region34: #{nlb_forward.1} parent=11 // pred_check_branch
        %223 = sbr.rel (%p221) target = $region36
      $region35: #{nlb_forward.1} parent=11 // pred_region
        _
      $region36: #{nlb_forward.1} parent=11 // pred_fallthru
        _
    $region12: #{nlb_forward.1} parent=5 // pred_fallthru
      _
    %p224 = scmp.lt.s32.totalorder %s13, 2
    // Predicated region
    $region37: #{nlb_forward.1} parent=5 // pred_check
      %p225 = pneg %p224
    $region38: #{nlb_forward.1} parent=5 // pred_check_branch
      %227 = sbr.rel (%p225) target = $region40
    $region39: #{nlb_forward.1} parent=5 // pred_region
      // Predicated region
      $region41: #{nlb_forward.1} parent=39 // pred_check
        %p228 = pneg %p33
      $region42: #{nlb_forward.1} parent=39 // pred_check_branch
        %230 = sbr.rel (%p228) target = $region44
      $region43: #{nlb_forward.1} parent=39 // pred_region
        %p231 = scmp.lt.s32.totalorder %s13, 1
        %s232 = scalar_select %p231, %s13, 1
        %s233 = smul.addr %s232, 32
        %s234 = smul.addr %s233, 8
        %s235 = scalar_lea.vmem %s0, %s234
      $region44: #{nlb_forward.1} parent=39 // pred_fallthru
        _
    $region40: #{nlb_forward.1} parent=5 // pred_fallthru
      _
    %p236 = scmp.le.s32.totalorder 1, %s13
    %p237 = scmp.lt.s32.totalorder %s13, 3
    %p238 = pnand %p236, %p237
    %p239 = pneg %p238
    // Predicated region
    $region45: #{nlb_forward.1} parent=5 // pred_check
      _
    $region46: #{nlb_forward.1} parent=5 // pred_check_branch
      %241 = sbr.rel (%p238) target = $region48
    $region47: #{nlb_forward.1} parent=5 // pred_region
      %s242 = ssub.s32 %s13, 1
      %p243 = scmp.lt.s32.totalorder %s18, 1
      %s244 = scalar_select %p243, %s18, 1
      %s245 = smul.addr %s244, 32
      %s246 = smul.addr %s245, 8
      %s247 = scalar_lea.vmem %s0, %s246
      %p248 = pneg %p39
      %p249 = pneg %p36
      %p250 = pneg %p60
      %p251 = pneg %p57
      %p252 = pneg %p81
      %p253 = pneg %p78
      %p254 = pneg %p102
      %p255 = pneg %p99
      %p256 = pneg %p123
      %p257 = pneg %p120
      %p258 = pneg %p144
      %p259 = pneg %p141
      %p260 = pneg %p165
      %p261 = pneg %p162
      %p262 = pneg %p191
      %p263 = pneg %p188
      %p264 = scmp.lt.s32.totalorder %s18, 1
      %s265 = scalar_select %p264, %s18, 1
      %s266 = smul.addr %s265, 32
      %s267 = smul.addr %s266, 8
      %s268 = scalar_lea.vmem %s7, %s267
      %p269 = scmp.lt.s32.totalorder %s18, 1
      %s270 = scalar_select %p269, %s18, 1
      %s271 = smul.addr %s270, 32
      %s272 = smul.addr %s271, 8
      %s273 = scalar_lea.vmem %s0, %s272
      %p274 = scmp.lt.s32.totalorder %s18, 1
      %s275 = scalar_select %p274, %s18, 1
      %s276 = smul.addr %s275, 32
      %s277 = smul.addr %s276, 8
      %s278 = scalar_lea.vmem %s7, %s277
      %v280 = vld [vmem:[%s273] sm:$0xff]
      %v281 = vld [vmem:[%s273 + $0x8] sm:$0xff]
      %v282 = vld [vmem:[%s273 + $0x10] sm:$0xff]
      %v283 = vld [vmem:[%s273 + $0x18] sm:$0xff]
      %v284 = vld [vmem:[%s273 + $0x20] sm:$0xff]
      %v285 = vld [vmem:[%s273 + $0x28] sm:$0xff]
      %v286 = vld [vmem:[%s273 + $0x30] sm:$0xff]
      %v287 = vld [vmem:[%s273 + $0x38] sm:$0xff]
      %v288 = vld [vmem:[%s273 + $0x40] sm:$0xff]
      %v289 = vld [vmem:[%s273 + $0x48] sm:$0xff]
      %v290 = vld [vmem:[%s273 + $0x50] sm:$0xff]
      %v291 = vld [vmem:[%s273 + $0x58] sm:$0xff]
      %v292 = vld [vmem:[%s273 + $0x60] sm:$0xff]
      %v293 = vld [vmem:[%s273 + $0x68] sm:$0xff]
      %v294 = vld [vmem:[%s273 + $0x70] sm:$0xff]
      %v295 = vld [vmem:[%s273 + $0x78] sm:$0xff]
      %v296 = vld [vmem:[%s273 + $0x80] sm:$0xff]
      %v297 = vld [vmem:[%s273 + $0x88] sm:$0xff]
      %v298 = vld [vmem:[%s273 + $0x90] sm:$0xff]
      %v299 = vld [vmem:[%s273 + $0x98] sm:$0xff]
      %v300 = vld [vmem:[%s273 + $0xa0] sm:$0xff]
      %v301 = vld [vmem:[%s273 + $0xa8] sm:$0xff]
      %v302 = vld [vmem:[%s273 + $0xb0] sm:$0xff]
      %v303 = vld [vmem:[%s273 + $0xb8] sm:$0xff]
      %v304 = vld [vmem:[%s273 + $0xc0] sm:$0xff]
      %v305 = vld [vmem:[%s273 + $0xc8] sm:$0xff]
      %v306 = vld [vmem:[%s273 + $0xd0] sm:$0xff]
      %v307 = vld [vmem:[%s273 + $0xd8] sm:$0xff]
      %v308 = vld [vmem:[%s273 + $0xe0] sm:$0xff]
      %v309 = vld [vmem:[%s273 + $0xe8] sm:$0xff]
      %v310 = vld [vmem:[%s273 + $0xf0] sm:$0xff]
      %v311 = vld [vmem:[%s273 + $0xf8] sm:$0xff]
      %v344 = vcombine.high %v280, %v280
      %v345 = vcombine.high %v281, %v281
      %v346 = vcombine.high %v282, %v282
      %v347 = vcombine.high %v283, %v283
      %v348 = vcombine.high %v284, %v284
      %v349 = vcombine.high %v285, %v285
      %v350 = vcombine.high %v286, %v286
      %v351 = vcombine.high %v287, %v287
      %v352 = vcombine.high %v288, %v288
      %v353 = vcombine.high %v289, %v289
      %v354 = vcombine.high %v290, %v290
      %v355 = vcombine.high %v291, %v291
      %v356 = vcombine.high %v292, %v292
      %v357 = vcombine.high %v293, %v293
      %v358 = vcombine.high %v294, %v294
      %v359 = vcombine.high %v295, %v295
      %v360 = vcombine.high %v296, %v296
      %v361 = vcombine.high %v297, %v297
      %v362 = vcombine.high %v298, %v298
      %v363 = vcombine.high %v299, %v299
      %v364 = vcombine.high %v300, %v300
      %v365 = vcombine.high %v301, %v301
      %v366 = vcombine.high %v302, %v302
      %v367 = vcombine.high %v303, %v303
      %v368 = vcombine.high %v304, %v304
      %v369 = vcombine.high %v305, %v305
      %v370 = vcombine.high %v306, %v306
      %v371 = vcombine.high %v307, %v307
      %v372 = vcombine.high %v308, %v308
      %v373 = vcombine.high %v309, %v309
      %v374 = vcombine.high %v310, %v310
      %v375 = vcombine.high %v311, %v311
      %v408 = vrot.slane %v280, 5
      %v409 = vrot.slane %v408, 4
      %v410 = vrot.slane %v344, 5
      %v411 = vrot.slane %v410, 4
      %v412 = vrot.slane %v281, 5
      %v413 = vrot.slane %v412, 4
      %v414 = vrot.slane %v345, 5
      %v415 = vrot.slane %v414, 4
      %v416 = vrot.slane %v282, 5
      %v417 = vrot.slane %v416, 4
      %v418 = vrot.slane %v346, 5
      %v419 = vrot.slane %v418, 4
      %v420 = vrot.slane %v283, 5
      %v421 = vrot.slane %v420, 4
      %v422 = vrot.slane %v347, 5
      %v423 = vrot.slane %v422, 4
      %v424 = vrot.slane %v284, 5
      %v425 = vrot.slane %v424, 4
      %v426 = vrot.slane %v348, 5
      %v427 = vrot.slane %v426, 4
      %v428 = vrot.slane %v285, 5
      %v429 = vrot.slane %v428, 4
      %v430 = vrot.slane %v349, 5
      %v431 = vrot.slane %v430, 4
      %v432 = vrot.slane %v286, 5
      %v433 = vrot.slane %v432, 4
      %v434 = vrot.slane %v350, 5
      %v435 = vrot.slane %v434, 4
      %v436 = vrot.slane %v287, 5
      %v437 = vrot.slane %v436, 4
      %v438 = vrot.slane %v351, 5
      %v439 = vrot.slane %v438, 4
      %v440 = vrot.slane %v288, 5
      %v441 = vrot.slane %v440, 4
      %v442 = vrot.slane %v352, 5
      %v443 = vrot.slane %v442, 4
      %v444 = vrot.slane %v289, 5
      %v445 = vrot.slane %v444, 4
      %v446 = vrot.slane %v353, 5
      %v447 = vrot.slane %v446, 4
      %v448 = vrot.slane %v290, 5
      %v449 = vrot.slane %v448, 4
      %v450 = vrot.slane %v354, 5
      %v451 = vrot.slane %v450, 4
      %v452 = vrot.slane %v291, 5
      %v453 = vrot.slane %v452, 4
      %v454 = vrot.slane %v355, 5
      %v455 = vrot.slane %v454, 4
      %v456 = vrot.slane %v292, 5
      %v457 = vrot.slane %v456, 4
      %v458 = vrot.slane %v356, 5
      %v459 = vrot.slane %v458, 4
      %v460 = vrot.slane %v293, 5
      %v461 = vrot.slane %v460, 4
      %v462 = vrot.slane %v357, 5
      %v463 = vrot.slane %v462, 4
      %v464 = vrot.slane %v294, 5
      %v465 = vrot.slane %v464, 4
      %v466 = vrot.slane %v358, 5
      %v467 = vrot.slane %v466, 4
      %v468 = vrot.slane %v295, 5
      %v469 = vrot.slane %v468, 4
      %v470 = vrot.slane %v359, 5
      %v471 = vrot.slane %v470, 4
      %v472 = vrot.slane %v296, 5
      %v473 = vrot.slane %v472, 4
      %v474 = vrot.slane %v360, 5
      %v475 = vrot.slane %v474, 4
      %v476 = vrot.slane %v297, 5
      %v477 = vrot.slane %v476, 4
      %v478 = vrot.slane %v361, 5
      %v479 = vrot.slane %v478, 4
      %v480 = vrot.slane %v298, 5
      %v481 = vrot.slane %v480, 4
      %v482 = vrot.slane %v362, 5
      %v483 = vrot.slane %v482, 4
      %v484 = vrot.slane %v299, 5
      %v485 = vrot.slane %v484, 4
      %v486 = vrot.slane %v363, 5
      %v487 = vrot.slane %v486, 4
      %v488 = vrot.slane %v300, 5
      %v489 = vrot.slane %v488, 4
      %v490 = vrot.slane %v364, 5
      %v491 = vrot.slane %v490, 4
      %v492 = vrot.slane %v301, 5
      %v493 = vrot.slane %v492, 4
      %v494 = vrot.slane %v365, 5
      %v495 = vrot.slane %v494, 4
      %v496 = vrot.slane %v302, 5
      %v497 = vrot.slane %v496, 4
      %v498 = vrot.slane %v366, 5
      %v499 = vrot.slane %v498, 4
      %v500 = vrot.slane %v303, 5
      %v501 = vrot.slane %v500, 4
      %v502 = vrot.slane %v367, 5
      %v503 = vrot.slane %v502, 4
      %v504 = vrot.slane %v304, 5
      %v505 = vrot.slane %v504, 4
      %v506 = vrot.slane %v368, 5
      %v507 = vrot.slane %v506, 4
      %v508 = vrot.slane %v305, 5
      %v509 = vrot.slane %v508, 4
      %v510 = vrot.slane %v369, 5
      %v511 = vrot.slane %v510, 4
      %v512 = vrot.slane %v306, 5
      %v513 = vrot.slane %v512, 4
      %v514 = vrot.slane %v370, 5
      %v515 = vrot.slane %v514, 4
      %v516 = vrot.slane %v307, 5
      %v517 = vrot.slane %v516, 4
      %v518 = vrot.slane %v371, 5
      %v519 = vrot.slane %v518, 4
      %v520 = vrot.slane %v308, 5
      %v521 = vrot.slane %v520, 4
      %v522 = vrot.slane %v372, 5
      %v523 = vrot.slane %v522, 4
      %v524 = vrot.slane %v309, 5
      %v525 = vrot.slane %v524, 4
      %v526 = vrot.slane %v373, 5
      %v527 = vrot.slane %v526, 4
      %v528 = vrot.slane %v310, 5
      %v529 = vrot.slane %v528, 4
      %v530 = vrot.slane %v374, 5
      %v531 = vrot.slane %v530, 4
      %v532 = vrot.slane %v311, 5
      %v533 = vrot.slane %v532, 4
      %v534 = vrot.slane %v375, 5
      %v535 = vrot.slane %v534, 4
      %v600 = vadd.f32 %v280, %v409
      %v601 = vadd.f32 %v344, %v411
      %v602 = vadd.f32 %v281, %v413
      %v603 = vadd.f32 %v345, %v415
      %v604 = vadd.f32 %v282, %v417
      %v605 = vadd.f32 %v346, %v419
      %v606 = vadd.f32 %v283, %v421
      %v607 = vadd.f32 %v347, %v423
      %v608 = vadd.f32 %v284, %v425
      %v609 = vadd.f32 %v348, %v427
      %v610 = vadd.f32 %v285, %v429
      %v611 = vadd.f32 %v349, %v431
      %v612 = vadd.f32 %v286, %v433
      %v613 = vadd.f32 %v350, %v435
      %v614 = vadd.f32 %v287, %v437
      %v615 = vadd.f32 %v351, %v439
      %v616 = vadd.f32 %v288, %v441
      %v617 = vadd.f32 %v352, %v443
      %v618 = vadd.f32 %v289, %v445
      %v619 = vadd.f32 %v353, %v447
      %v620 = vadd.f32 %v290, %v449
      %v621 = vadd.f32 %v354, %v451
      %v622 = vadd.f32 %v291, %v453
      %v623 = vadd.f32 %v355, %v455
      %v624 = vadd.f32 %v292, %v457
      %v625 = vadd.f32 %v356, %v459
      %v626 = vadd.f32 %v293, %v461
      %v627 = vadd.f32 %v357, %v463
      %v628 = vadd.f32 %v294, %v465
      %v629 = vadd.f32 %v358, %v467
      %v630 = vadd.f32 %v295, %v469
      %v631 = vadd.f32 %v359, %v471
      %v632 = vadd.f32 %v296, %v473
      %v633 = vadd.f32 %v360, %v475
      %v634 = vadd.f32 %v297, %v477
      %v635 = vadd.f32 %v361, %v479
      %v636 = vadd.f32 %v298, %v481
      %v637 = vadd.f32 %v362, %v483
      %v638 = vadd.f32 %v299, %v485
      %v639 = vadd.f32 %v363, %v487
      %v640 = vadd.f32 %v300, %v489
      %v641 = vadd.f32 %v364, %v491
      %v642 = vadd.f32 %v301, %v493
      %v643 = vadd.f32 %v365, %v495
      %v644 = vadd.f32 %v302, %v497
      %v645 = vadd.f32 %v366, %v499
      %v646 = vadd.f32 %v303, %v501
      %v647 = vadd.f32 %v367, %v503
      %v648 = vadd.f32 %v304, %v505
      %v649 = vadd.f32 %v368, %v507
      %v650 = vadd.f32 %v305, %v509
      %v651 = vadd.f32 %v369, %v511
      %v652 = vadd.f32 %v306, %v513
      %v653 = vadd.f32 %v370, %v515
      %v654 = vadd.f32 %v307, %v517
      %v655 = vadd.f32 %v371, %v519
      %v656 = vadd.f32 %v308, %v521
      %v657 = vadd.f32 %v372, %v523
      %v658 = vadd.f32 %v309, %v525
      %v659 = vadd.f32 %v373, %v527
      %v660 = vadd.f32 %v310, %v529
      %v661 = vadd.f32 %v374, %v531
      %v662 = vadd.f32 %v311, %v533
      %v663 = vadd.f32 %v375, %v535
      %v664 = vrot.slane %v280, 6
      %v665 = vrot.slane %v664, 4
      %v666 = vrot.slane %v344, 6
      %v667 = vrot.slane %v666, 4
      %v668 = vrot.slane %v281, 6
      %v669 = vrot.slane %v668, 4
      %v670 = vrot.slane %v345, 6
      %v671 = vrot.slane %v670, 4
      %v672 = vrot.slane %v282, 6
      %v673 = vrot.slane %v672, 4
      %v674 = vrot.slane %v346, 6
      %v675 = vrot.slane %v674, 4
      %v676 = vrot.slane %v283, 6
      %v677 = vrot.slane %v676, 4
      %v678 = vrot.slane %v347, 6
      %v679 = vrot.slane %v678, 4
      %v680 = vrot.slane %v284, 6
      %v681 = vrot.slane %v680, 4
      %v682 = vrot.slane %v348, 6
      %v683 = vrot.slane %v682, 4
      %v684 = vrot.slane %v285, 6
      %v685 = vrot.slane %v684, 4
      %v686 = vrot.slane %v349, 6
      %v687 = vrot.slane %v686, 4
      %v688 = vrot.slane %v286, 6
      %v689 = vrot.slane %v688, 4
      %v690 = vrot.slane %v350, 6
      %v691 = vrot.slane %v690, 4
      %v692 = vrot.slane %v287, 6
      %v693 = vrot.slane %v692, 4
      %v694 = vrot.slane %v351, 6
      %v695 = vrot.slane %v694, 4
      %v696 = vrot.slane %v288, 6
      %v697 = vrot.slane %v696, 4
      %v698 = vrot.slane %v352, 6
      %v699 = vrot.slane %v698, 4
      %v700 = vrot.slane %v289, 6
      %v701 = vrot.slane %v700, 4
      %v702 = vrot.slane %v353, 6
      %v703 = vrot.slane %v702, 4
      %v704 = vrot.slane %v290, 6
      %v705 = vrot.slane %v704, 4
      %v706 = vrot.slane %v354, 6
      %v707 = vrot.slane %v706, 4
      %v708 = vrot.slane %v291, 6
      %v709 = vrot.slane %v708, 4
      %v710 = vrot.slane %v355, 6
      %v711 = vrot.slane %v710, 4
      %v712 = vrot.slane %v292, 6
      %v713 = vrot.slane %v712, 4
      %v714 = vrot.slane %v356, 6
      %v715 = vrot.slane %v714, 4
      %v716 = vrot.slane %v293, 6
      %v717 = vrot.slane %v716, 4
      %v718 = vrot.slane %v357, 6
      %v719 = vrot.slane %v718, 4
      %v720 = vrot.slane %v294, 6
      %v721 = vrot.slane %v720, 4
      %v722 = vrot.slane %v358, 6
      %v723 = vrot.slane %v722, 4
      %v724 = vrot.slane %v295, 6
      %v725 = vrot.slane %v724, 4
      %v726 = vrot.slane %v359, 6
      %v727 = vrot.slane %v726, 4
      %v728 = vrot.slane %v296, 6
      %v729 = vrot.slane %v728, 4
      %v730 = vrot.slane %v360, 6
      %v731 = vrot.slane %v730, 4
      %v732 = vrot.slane %v297, 6
      %v733 = vrot.slane %v732, 4
      %v734 = vrot.slane %v361, 6
      %v735 = vrot.slane %v734, 4
      %v736 = vrot.slane %v298, 6
      %v737 = vrot.slane %v736, 4
      %v738 = vrot.slane %v362, 6
      %v739 = vrot.slane %v738, 4
      %v740 = vrot.slane %v299, 6
      %v741 = vrot.slane %v740, 4
      %v742 = vrot.slane %v363, 6
      %v743 = vrot.slane %v742, 4
      %v744 = vrot.slane %v300, 6
      %v745 = vrot.slane %v744, 4
      %v746 = vrot.slane %v364, 6
      %v747 = vrot.slane %v746, 4
      %v748 = vrot.slane %v301, 6
      %v749 = vrot.slane %v748, 4
      %v750 = vrot.slane %v365, 6
      %v751 = vrot.slane %v750, 4
      %v752 = vrot.slane %v302, 6
      %v753 = vrot.slane %v752, 4
      %v754 = vrot.slane %v366, 6
      %v755 = vrot.slane %v754, 4
      %v756 = vrot.slane %v303, 6
      %v757 = vrot.slane %v756, 4
      %v758 = vrot.slane %v367, 6
      %v759 = vrot.slane %v758, 4
      %v760 = vrot.slane %v304, 6
      %v761 = vrot.slane %v760, 4
      %v762 = vrot.slane %v368, 6
      %v763 = vrot.slane %v762, 4
      %v764 = vrot.slane %v305, 6
      %v765 = vrot.slane %v764, 4
      %v766 = vrot.slane %v369, 6
      %v767 = vrot.slane %v766, 4
      %v768 = vrot.slane %v306, 6
      %v769 = vrot.slane %v768, 4
      %v770 = vrot.slane %v370, 6
      %v771 = vrot.slane %v770, 4
      %v772 = vrot.slane %v307, 6
      %v773 = vrot.slane %v772, 4
      %v774 = vrot.slane %v371, 6
      %v775 = vrot.slane %v774, 4
      %v776 = vrot.slane %v308, 6
      %v777 = vrot.slane %v776, 4
      %v778 = vrot.slane %v372, 6
      %v779 = vrot.slane %v778, 4
      %v780 = vrot.slane %v309, 6
      %v781 = vrot.slane %v780, 4
      %v782 = vrot.slane %v373, 6
      %v783 = vrot.slane %v782, 4
      %v784 = vrot.slane %v310, 6
      %v785 = vrot.slane %v784, 4
      %v786 = vrot.slane %v374, 6
      %v787 = vrot.slane %v786, 4
      %v788 = vrot.slane %v311, 6
      %v789 = vrot.slane %v788, 4
      %v790 = vrot.slane %v375, 6
      %v791 = vrot.slane %v790, 4
      %v856 = vadd.f32 %v600, %v665
      %v857 = vadd.f32 %v601, %v667
      %v858 = vadd.f32 %v602, %v669
      %v859 = vadd.f32 %v603, %v671
      %v860 = vadd.f32 %v604, %v673
      %v861 = vadd.f32 %v605, %v675
      %v862 = vadd.f32 %v606, %v677
      %v863 = vadd.f32 %v607, %v679
      %v864 = vadd.f32 %v608, %v681
      %v865 = vadd.f32 %v609, %v683
      %v866 = vadd.f32 %v610, %v685
      %v867 = vadd.f32 %v611, %v687
      %v868 = vadd.f32 %v612, %v689
      %v869 = vadd.f32 %v613, %v691
      %v870 = vadd.f32 %v614, %v693
      %v871 = vadd.f32 %v615, %v695
      %v872 = vadd.f32 %v616, %v697
      %v873 = vadd.f32 %v617, %v699
      %v874 = vadd.f32 %v618, %v701
      %v875 = vadd.f32 %v619, %v703
      %v876 = vadd.f32 %v620, %v705
      %v877 = vadd.f32 %v621, %v707
      %v878 = vadd.f32 %v622, %v709
      %v879 = vadd.f32 %v623, %v711
      %v880 = vadd.f32 %v624, %v713
      %v881 = vadd.f32 %v625, %v715
      %v882 = vadd.f32 %v626, %v717
      %v883 = vadd.f32 %v627, %v719
      %v884 = vadd.f32 %v628, %v721
      %v885 = vadd.f32 %v629, %v723
      %v886 = vadd.f32 %v630, %v725
      %v887 = vadd.f32 %v631, %v727
      %v888 = vadd.f32 %v632, %v729
      %v889 = vadd.f32 %v633, %v731
      %v890 = vadd.f32 %v634, %v733
      %v891 = vadd.f32 %v635, %v735
      %v892 = vadd.f32 %v636, %v737
      %v893 = vadd.f32 %v637, %v739
      %v894 = vadd.f32 %v638, %v741
      %v895 = vadd.f32 %v639, %v743
      %v896 = vadd.f32 %v640, %v745
      %v897 = vadd.f32 %v641, %v747
      %v898 = vadd.f32 %v642, %v749
      %v899 = vadd.f32 %v643, %v751
      %v900 = vadd.f32 %v644, %v753
      %v901 = vadd.f32 %v645, %v755
      %v902 = vadd.f32 %v646, %v757
      %v903 = vadd.f32 %v647, %v759
      %v904 = vadd.f32 %v648, %v761
      %v905 = vadd.f32 %v649, %v763
      %v906 = vadd.f32 %v650, %v765
      %v907 = vadd.f32 %v651, %v767
      %v908 = vadd.f32 %v652, %v769
      %v909 = vadd.f32 %v653, %v771
      %v910 = vadd.f32 %v654, %v773
      %v911 = vadd.f32 %v655, %v775
      %v912 = vadd.f32 %v656, %v777
      %v913 = vadd.f32 %v657, %v779
      %v914 = vadd.f32 %v658, %v781
      %v915 = vadd.f32 %v659, %v783
      %v916 = vadd.f32 %v660, %v785
      %v917 = vadd.f32 %v661, %v787
      %v918 = vadd.f32 %v662, %v789
      %v919 = vadd.f32 %v663, %v791
      %v920 = vrot.slane %v280, 7
      %v921 = vrot.slane %v920, 4
      %v922 = vrot.slane %v344, 7
      %v923 = vrot.slane %v922, 4
      %v924 = vrot.slane %v281, 7
      %v925 = vrot.slane %v924, 4
      %v926 = vrot.slane %v345, 7
      %v927 = vrot.slane %v926, 4
      %v928 = vrot.slane %v282, 7
      %v929 = vrot.slane %v928, 4
      %v930 = vrot.slane %v346, 7
      %v931 = vrot.slane %v930, 4
      %v932 = vrot.slane %v283, 7
      %v933 = vrot.slane %v932, 4
      %v934 = vrot.slane %v347, 7
      %v935 = vrot.slane %v934, 4
      %v936 = vrot.slane %v284, 7
      %v937 = vrot.slane %v936, 4
      %v938 = vrot.slane %v348, 7
      %v939 = vrot.slane %v938, 4
      %v940 = vrot.slane %v285, 7
      %v941 = vrot.slane %v940, 4
      %v942 = vrot.slane %v349, 7
      %v943 = vrot.slane %v942, 4
      %v944 = vrot.slane %v286, 7
      %v945 = vrot.slane %v944, 4
      %v946 = vrot.slane %v350, 7
      %v947 = vrot.slane %v946, 4
      %v948 = vrot.slane %v287, 7
      %v949 = vrot.slane %v948, 4
      %v950 = vrot.slane %v351, 7
      %v951 = vrot.slane %v950, 4
      %v952 = vrot.slane %v288, 7
      %v953 = vrot.slane %v952, 4
      %v954 = vrot.slane %v352, 7
      %v955 = vrot.slane %v954, 4
      %v956 = vrot.slane %v289, 7
      %v957 = vrot.slane %v956, 4
      %v958 = vrot.slane %v353, 7
      %v959 = vrot.slane %v958, 4
      %v960 = vrot.slane %v290, 7
      %v961 = vrot.slane %v960, 4
      %v962 = vrot.slane %v354, 7
      %v963 = vrot.slane %v962, 4
      %v964 = vrot.slane %v291, 7
      %v965 = vrot.slane %v964, 4
      %v966 = vrot.slane %v355, 7
      %v967 = vrot.slane %v966, 4
      %v968 = vrot.slane %v292, 7
      %v969 = vrot.slane %v968, 4
      %v970 = vrot.slane %v356, 7
      %v971 = vrot.slane %v970, 4
      %v972 = vrot.slane %v293, 7
      %v973 = vrot.slane %v972, 4
      %v974 = vrot.slane %v357, 7
      %v975 = vrot.slane %v974, 4
      %v976 = vrot.slane %v294, 7
      %v977 = vrot.slane %v976, 4
      %v978 = vrot.slane %v358, 7
      %v979 = vrot.slane %v978, 4
      %v980 = vrot.slane %v295, 7
      %v981 = vrot.slane %v980, 4
      %v982 = vrot.slane %v359, 7
      %v983 = vrot.slane %v982, 4
      %v984 = vrot.slane %v296, 7
      %v985 = vrot.slane %v984, 4
      %v986 = vrot.slane %v360, 7
      %v987 = vrot.slane %v986, 4
      %v988 = vrot.slane %v297, 7
      %v989 = vrot.slane %v988, 4
      %v990 = vrot.slane %v361, 7
      %v991 = vrot.slane %v990, 4
      %v992 = vrot.slane %v298, 7
      %v993 = vrot.slane %v992, 4
      %v994 = vrot.slane %v362, 7
      %v995 = vrot.slane %v994, 4
      %v996 = vrot.slane %v299, 7
      %v997 = vrot.slane %v996, 4
      %v998 = vrot.slane %v363, 7
      %v999 = vrot.slane %v998, 4
      %v1000 = vrot.slane %v300, 7
      %v1001 = vrot.slane %v1000, 4
      %v1002 = vrot.slane %v364, 7
      %v1003 = vrot.slane %v1002, 4
      %v1004 = vrot.slane %v301, 7
      %v1005 = vrot.slane %v1004, 4
      %v1006 = vrot.slane %v365, 7
      %v1007 = vrot.slane %v1006, 4
      %v1008 = vrot.slane %v302, 7
      %v1009 = vrot.slane %v1008, 4
      %v1010 = vrot.slane %v366, 7
      %v1011 = vrot.slane %v1010, 4
      %v1012 = vrot.slane %v303, 7
      %v1013 = vrot.slane %v1012, 4
      %v1014 = vrot.slane %v367, 7
      %v1015 = vrot.slane %v1014, 4
      %v1016 = vrot.slane %v304, 7
      %v1017 = vrot.slane %v1016, 4
      %v1018 = vrot.slane %v368, 7
      %v1019 = vrot.slane %v1018, 4
      %v1020 = vrot.slane %v305, 7
      %v1021 = vrot.slane %v1020, 4
      %v1022 = vrot.slane %v369, 7
      %v1023 = vrot.slane %v1022, 4
      %v1024 = vrot.slane %v306, 7
      %v1025 = vrot.slane %v1024, 4
      %v1026 = vrot.slane %v370, 7
      %v1027 = vrot.slane %v1026, 4
      %v1028 = vrot.slane %v307, 7
      %v1029 = vrot.slane %v1028, 4
      %v1030 = vrot.slane %v371, 7
      %v1031 = vrot.slane %v1030, 4
      %v1032 = vrot.slane %v308, 7
      %v1033 = vrot.slane %v1032, 4
      %v1034 = vrot.slane %v372, 7
      %v1035 = vrot.slane %v1034, 4
      %v1036 = vrot.slane %v309, 7
      %v1037 = vrot.slane %v1036, 4
      %v1038 = vrot.slane %v373, 7
      %v1039 = vrot.slane %v1038, 4
      %v1040 = vrot.slane %v310, 7
      %v1041 = vrot.slane %v1040, 4
      %v1042 = vrot.slane %v374, 7
      %v1043 = vrot.slane %v1042, 4
      %v1044 = vrot.slane %v311, 7
      %v1045 = vrot.slane %v1044, 4
      %v1046 = vrot.slane %v375, 7
      %v1047 = vrot.slane %v1046, 4
      %v1112 = vadd.f32 %v856, %v921
      %v1113 = vadd.f32 %v857, %v923
      %v1114 = vadd.f32 %v858, %v925
      %v1115 = vadd.f32 %v859, %v927
      %v1116 = vadd.f32 %v860, %v929
      %v1117 = vadd.f32 %v861, %v931
      %v1118 = vadd.f32 %v862, %v933
      %v1119 = vadd.f32 %v863, %v935
      %v1120 = vadd.f32 %v864, %v937
      %v1121 = vadd.f32 %v865, %v939
      %v1122 = vadd.f32 %v866, %v941
      %v1123 = vadd.f32 %v867, %v943
      %v1124 = vadd.f32 %v868, %v945
      %v1125 = vadd.f32 %v869, %v947
      %v1126 = vadd.f32 %v870, %v949
      %v1127 = vadd.f32 %v871, %v951
      %v1128 = vadd.f32 %v872, %v953
      %v1129 = vadd.f32 %v873, %v955
      %v1130 = vadd.f32 %v874, %v957
      %v1131 = vadd.f32 %v875, %v959
      %v1132 = vadd.f32 %v876, %v961
      %v1133 = vadd.f32 %v877, %v963
      %v1134 = vadd.f32 %v878, %v965
      %v1135 = vadd.f32 %v879, %v967
      %v1136 = vadd.f32 %v880, %v969
      %v1137 = vadd.f32 %v881, %v971
      %v1138 = vadd.f32 %v882, %v973
      %v1139 = vadd.f32 %v883, %v975
      %v1140 = vadd.f32 %v884, %v977
      %v1141 = vadd.f32 %v885, %v979
      %v1142 = vadd.f32 %v886, %v981
      %v1143 = vadd.f32 %v887, %v983
      %v1144 = vadd.f32 %v888, %v985
      %v1145 = vadd.f32 %v889, %v987
      %v1146 = vadd.f32 %v890, %v989
      %v1147 = vadd.f32 %v891, %v991
      %v1148 = vadd.f32 %v892, %v993
      %v1149 = vadd.f32 %v893, %v995
      %v1150 = vadd.f32 %v894, %v997
      %v1151 = vadd.f32 %v895, %v999
      %v1152 = vadd.f32 %v896, %v1001
      %v1153 = vadd.f32 %v897, %v1003
      %v1154 = vadd.f32 %v898, %v1005
      %v1155 = vadd.f32 %v899, %v1007
      %v1156 = vadd.f32 %v900, %v1009
      %v1157 = vadd.f32 %v901, %v1011
      %v1158 = vadd.f32 %v902, %v1013
      %v1159 = vadd.f32 %v903, %v1015
      %v1160 = vadd.f32 %v904, %v1017
      %v1161 = vadd.f32 %v905, %v1019
      %v1162 = vadd.f32 %v906, %v1021
      %v1163 = vadd.f32 %v907, %v1023
      %v1164 = vadd.f32 %v908, %v1025
      %v1165 = vadd.f32 %v909, %v1027
      %v1166 = vadd.f32 %v910, %v1029
      %v1167 = vadd.f32 %v911, %v1031
      %v1168 = vadd.f32 %v912, %v1033
      %v1169 = vadd.f32 %v913, %v1035
      %v1170 = vadd.f32 %v914, %v1037
      %v1171 = vadd.f32 %v915, %v1039
      %v1172 = vadd.f32 %v916, %v1041
      %v1173 = vadd.f32 %v917, %v1043
      %v1174 = vadd.f32 %v918, %v1045
      %v1175 = vadd.f32 %v919, %v1047
      %v1176 = vmul.f32 %v1112, 0.25
      %v1177 = vmul.f32 %v1113, 0.25
      %v1178 = vmul.f32 %v1114, 0.25
      %v1179 = vmul.f32 %v1115, 0.25
      %v1180 = vmul.f32 %v1116, 0.25
      %v1181 = vmul.f32 %v1117, 0.25
      %v1182 = vmul.f32 %v1118, 0.25
      %v1183 = vmul.f32 %v1119, 0.25
      %v1184 = vmul.f32 %v1120, 0.25
      %v1185 = vmul.f32 %v1121, 0.25
      %v1186 = vmul.f32 %v1122, 0.25
      %v1187 = vmul.f32 %v1123, 0.25
      %v1188 = vmul.f32 %v1124, 0.25
      %v1189 = vmul.f32 %v1125, 0.25
      %v1190 = vmul.f32 %v1126, 0.25
      %v1191 = vmul.f32 %v1127, 0.25
      %v1192 = vmul.f32 %v1128, 0.25
      %v1193 = vmul.f32 %v1129, 0.25
      %v1194 = vmul.f32 %v1130, 0.25
      %v1195 = vmul.f32 %v1131, 0.25
      %v1196 = vmul.f32 %v1132, 0.25
      %v1197 = vmul.f32 %v1133, 0.25
      %v1198 = vmul.f32 %v1134, 0.25
      %v1199 = vmul.f32 %v1135, 0.25
      %v1200 = vmul.f32 %v1136, 0.25
      %v1201 = vmul.f32 %v1137, 0.25
      %v1202 = vmul.f32 %v1138, 0.25
      %v1203 = vmul.f32 %v1139, 0.25
      %v1204 = vmul.f32 %v1140, 0.25
      %v1205 = vmul.f32 %v1141, 0.25
      %v1206 = vmul.f32 %v1142, 0.25
      %v1207 = vmul.f32 %v1143, 0.25
      %v1208 = vmul.f32 %v1144, 0.25
      %v1209 = vmul.f32 %v1145, 0.25
      %v1210 = vmul.f32 %v1146, 0.25
      %v1211 = vmul.f32 %v1147, 0.25
      %v1212 = vmul.f32 %v1148, 0.25
      %v1213 = vmul.f32 %v1149, 0.25
      %v1214 = vmul.f32 %v1150, 0.25
      %v1215 = vmul.f32 %v1151, 0.25
      %v1216 = vmul.f32 %v1152, 0.25
      %v1217 = vmul.f32 %v1153, 0.25
      %v1218 = vmul.f32 %v1154, 0.25
      %v1219 = vmul.f32 %v1155, 0.25
      %v1220 = vmul.f32 %v1156, 0.25
      %v1221 = vmul.f32 %v1157, 0.25
      %v1222 = vmul.f32 %v1158, 0.25
      %v1223 = vmul.f32 %v1159, 0.25
      %v1224 = vmul.f32 %v1160, 0.25
      %v1225 = vmul.f32 %v1161, 0.25
      %v1226 = vmul.f32 %v1162, 0.25
      %v1227 = vmul.f32 %v1163, 0.25
      %v1228 = vmul.f32 %v1164, 0.25
      %v1229 = vmul.f32 %v1165, 0.25
      %v1230 = vmul.f32 %v1166, 0.25
      %v1231 = vmul.f32 %v1167, 0.25
      %v1232 = vmul.f32 %v1168, 0.25
      %v1233 = vmul.f32 %v1169, 0.25
      %v1234 = vmul.f32 %v1170, 0.25
      %v1235 = vmul.f32 %v1171, 0.25
      %v1236 = vmul.f32 %v1172, 0.25
      %v1237 = vmul.f32 %v1173, 0.25
      %v1238 = vmul.f32 %v1174, 0.25
      %v1239 = vmul.f32 %v1175, 0.25
      %v1240 = vadd.f32 %v1176, %v1180
      %v1241 = vadd.f32 %v1177, %v1181
      %v1242 = vadd.f32 %v1178, %v1182
      %v1243 = vadd.f32 %v1179, %v1183
      %v1244 = vadd.f32 %v1192, %v1196
      %v1245 = vadd.f32 %v1193, %v1197
      %v1246 = vadd.f32 %v1194, %v1198
      %v1247 = vadd.f32 %v1195, %v1199
      %v1248 = vadd.f32 %v1208, %v1212
      %v1249 = vadd.f32 %v1209, %v1213
      %v1250 = vadd.f32 %v1210, %v1214
      %v1251 = vadd.f32 %v1211, %v1215
      %v1252 = vadd.f32 %v1224, %v1228
      %v1253 = vadd.f32 %v1225, %v1229
      %v1254 = vadd.f32 %v1226, %v1230
      %v1255 = vadd.f32 %v1227, %v1231
      %v1256 = vadd.f32 %v1240, %v1184
      %v1257 = vadd.f32 %v1241, %v1185
      %v1258 = vadd.f32 %v1242, %v1186
      %v1259 = vadd.f32 %v1243, %v1187
      %v1260 = vadd.f32 %v1244, %v1200
      %v1261 = vadd.f32 %v1245, %v1201
      %v1262 = vadd.f32 %v1246, %v1202
      %v1263 = vadd.f32 %v1247, %v1203
      %v1264 = vadd.f32 %v1248, %v1216
      %v1265 = vadd.f32 %v1249, %v1217
      %v1266 = vadd.f32 %v1250, %v1218
      %v1267 = vadd.f32 %v1251, %v1219
      %v1268 = vadd.f32 %v1252, %v1232
      %v1269 = vadd.f32 %v1253, %v1233
      %v1270 = vadd.f32 %v1254, %v1234
      %v1271 = vadd.f32 %v1255, %v1235
      %v1272 = vadd.f32 %v1256, %v1188
      %v1273 = vadd.f32 %v1257, %v1189
      %v1274 = vadd.f32 %v1258, %v1190
      %v1275 = vadd.f32 %v1259, %v1191
      %v1276 = vadd.f32 %v1260, %v1204
      %v1277 = vadd.f32 %v1261, %v1205
      %v1278 = vadd.f32 %v1262, %v1206
      %v1279 = vadd.f32 %v1263, %v1207
      %v1280 = vadd.f32 %v1264, %v1220
      %v1281 = vadd.f32 %v1265, %v1221
      %v1282 = vadd.f32 %v1266, %v1222
      %v1283 = vadd.f32 %v1267, %v1223
      %v1284 = vadd.f32 %v1268, %v1236
      %v1285 = vadd.f32 %v1269, %v1237
      %v1286 = vadd.f32 %v1270, %v1238
      %v1287 = vadd.f32 %v1271, %v1239
      %v1288 = vmul.f32 %v1272, 0.25
      %v1289 = vmul.f32 %v1273, 0.25
      %v1290 = vmul.f32 %v1274, 0.25
      %v1291 = vmul.f32 %v1275, 0.25
      %v1292 = vmul.f32 %v1276, 0.25
      %v1293 = vmul.f32 %v1277, 0.25
      %v1294 = vmul.f32 %v1278, 0.25
      %v1295 = vmul.f32 %v1279, 0.25
      %v1296 = vmul.f32 %v1280, 0.25
      %v1297 = vmul.f32 %v1281, 0.25
      %v1298 = vmul.f32 %v1282, 0.25
      %v1299 = vmul.f32 %v1283, 0.25
      %v1300 = vmul.f32 %v1284, 0.25
      %v1301 = vmul.f32 %v1285, 0.25
      %v1302 = vmul.f32 %v1286, 0.25
      %v1303 = vmul.f32 %v1287, 0.25
      %v1304 = vpack.c.bf16 %v1288, %v1288
      %v1305 = vpack.c.bf16 %v1289, %v1289
      %v1306 = vpack.c.bf16 %v1290, %v1290
      %v1307 = vpack.c.bf16 %v1291, %v1291
      %v1308 = vpack.c.bf16 %v1292, %v1292
      %v1309 = vpack.c.bf16 %v1293, %v1293
      %v1310 = vpack.c.bf16 %v1294, %v1294
      %v1311 = vpack.c.bf16 %v1295, %v1295
      %v1312 = vpack.c.bf16 %v1296, %v1296
      %v1313 = vpack.c.bf16 %v1297, %v1297
      %v1314 = vpack.c.bf16 %v1298, %v1298
      %v1315 = vpack.c.bf16 %v1299, %v1299
      %v1316 = vpack.c.bf16 %v1300, %v1300
      %v1317 = vpack.c.bf16 %v1301, %v1301
      %v1318 = vpack.c.bf16 %v1302, %v1302
      %v1319 = vpack.c.bf16 %v1303, %v1303
      %v1320 = vld [vmem:[%s1] sm:$0x3]
      %v1321 = vld [vmem:[%s2] sm:$0x1]
      %v1323 = vlaneseq
      %v1324 = vshrl.u32 %v1323, 7
      %v1325 = vsub.s32 0, %v1324
      %v1326 = vrot.slane %v1321, %v1325
      %v1344 = vunpack.c.l.b16 %v1304
      %v1345 = vunpack.c.l.b16 %v1305
      %v1346 = vunpack.c.l.b16 %v1306
      %v1347 = vunpack.c.l.b16 %v1307
      %v1348 = vunpack.c.l.b16 %v1308
      %v1349 = vunpack.c.l.b16 %v1309
      %v1350 = vunpack.c.l.b16 %v1310
      %v1351 = vunpack.c.l.b16 %v1311
      %v1352 = vunpack.c.l.b16 %v1312
      %v1353 = vunpack.c.l.b16 %v1313
      %v1354 = vunpack.c.l.b16 %v1314
      %v1355 = vunpack.c.l.b16 %v1315
      %v1356 = vunpack.c.l.b16 %v1316
      %v1357 = vunpack.c.l.b16 %v1317
      %v1358 = vunpack.c.l.b16 %v1318
      %v1359 = vunpack.c.l.b16 %v1319
      %v1360 = vrot.slane %v1345, 7
      %vm1361 = vcmask 1041409
      %v1362 = vsel %vm1361, %v1360, %v1344
      %v1363 = vrot.slane %v1346, 6
      %vm1364 = vcmask 1042434
      %v1365 = vsel %vm1364, %v1363, %v1362
      %v1366 = vrot.slane %v1347, 5
      %vm1367 = vcmask 1043459
      %v1368 = vsel %vm1367, %v1366, %v1365
      %v1369 = vrot.slane %v1348, 4
      %vm1370 = vcmask 1044484
      %v1371 = vsel %vm1370, %v1369, %v1368
      %v1372 = vrot.slane %v1349, 3
      %vm1373 = vcmask 1045509
      %v1374 = vsel %vm1373, %v1372, %v1371
      %v1375 = vrot.slane %v1350, 2
      %vm1376 = vcmask 1046534
      %v1377 = vsel %vm1376, %v1375, %v1374
      %v1378 = vrot.slane %v1351, 1
      %vm1379 = vcmask 1047559
      %v1380 = vsel %vm1379, %v1378, %v1377
      %v1381 = vrot.slane %v1353, 7
      %v1382 = vsel %vm1361, %v1381, %v1352
      %v1383 = vrot.slane %v1354, 6
      %v1384 = vsel %vm1364, %v1383, %v1382
      %v1385 = vrot.slane %v1355, 5
      %v1386 = vsel %vm1367, %v1385, %v1384
      %v1387 = vrot.slane %v1356, 4
      %v1388 = vsel %vm1370, %v1387, %v1386
      %v1389 = vrot.slane %v1357, 3
      %v1390 = vsel %vm1373, %v1389, %v1388
      %v1391 = vrot.slane %v1358, 2
      %v1392 = vsel %vm1376, %v1391, %v1390
      %v1393 = vrot.slane %v1359, 1
      %v1394 = vsel %vm1379, %v1393, %v1392
      %v1395 = vpack.c.b16 %v1394, %v1380
      %vm1396 = vcmask 31744
      %v1398 = vsel %vm1396, %v1395, 0
      %vm1400 = vcmask 1041408
      %v1402 = vsel %vm1400, %v1320, 0
      %1404 = vmatprep.subr.bf16.mxu0 0
      %1405 = vmatpush1.bf16.msra.mxu0 %v1402
      %1406 = vmatprep.subr.bf16.mxu0 0
      %1407 = vmatpush1.bf16.msra.mxu0 0
      %1408 = vmatprep.subr.bf16.mxu0 0
      %1409 = vmatpush1.bf16.msra.mxu0 0
      %1410 = vmatprep.subr.bf16.mxu0 0
      %1411 = vmatpush1.bf16.msra.mxu0 0
      %1412 = vmatprep.subr.bf16.mxu0 0
      %1413 = vmatpush1.bf16.msra.mxu0 0
      %1414 = vmatprep.subr.bf16.mxu0 0
      %1415 = vmatpush1.bf16.msra.mxu0 0
      %1416 = vmatprep.subr.bf16.mxu0 0
      %1417 = vmatpush1.bf16.msra.mxu0 0
      %1418 = vmatprep.subr.bf16.mxu0 0
      %1419 = vmatpush1.bf16.msra.mxu0 0
      %1420 = vmatprep.subr.bf16.mxu0 0
      %1421 = vmatpush1.bf16.msra.mxu0 0
      %1422 = vmatprep.subr.bf16.mxu0 0
      %1423 = vmatpush1.bf16.msra.mxu0 0
      %1424 = vmatprep.subr.bf16.mxu0 0
      %1425 = vmatpush1.bf16.msra.mxu0 0
      %1426 = vmatprep.subr.bf16.mxu0 0
      %1427 = vmatpush1.bf16.msra.mxu0 0
      %1428 = vmatprep.subr.bf16.mxu0 0
      %1429 = vmatpush1.bf16.msra.mxu0 0
      %1430 = vmatprep.subr.bf16.mxu0 0
      %1431 = vmatpush1.bf16.msra.mxu0 0
      %1432 = vmatprep.subr.bf16.mxu0 0
      %1433 = vmatpush1.bf16.msra.mxu0 0
      %1434 = vmatprep.subr.bf16.mxu0 0
      %1435 = vmatpush1.bf16.msra.mxu0 0
      %1436 = vmatprep.mubr.bf16.mxu0 0
      %1437 = vmatmul.mubr.bf16.gmra.mrb[0].mxu0 %v1398
      %v1438 = vpop.f32.mrb[0].mxu0
      %v1439 = vadd.f32 %v1326, %v1438
      %v1440 = vpop.f32.mrb[0].mxu0
      %v1441 = vpop.f32.mrb[0].mxu0
      %v1442 = vadd.f32 %v1326, %v1441
      %v1443 = vpop.f32.mrb[0].mxu0
      %1444 = vdwg.mxu0
      %v1447 = vcombine.high %v1439, %v1439
      %v1449 = vunpack.c.l.s4 1983009808
      %v1450 = vunpack.c.0.s8 %v1449
      %v1451 = vlaneseq
      %v1452 = vshrl.u32 %v1451, 7
      %v1453 = vsub.s32 %v1450, %v1452
      %v1454 = vrot.slane %v1439, %v1453
      %v1456 = vunpack.c.l.s4 1983009808
      %v1457 = vunpack.c.0.s8 %v1456
      %v1458 = vlaneseq
      %v1459 = vshrl.u32 %v1458, 7
      %v1460 = vsub.s32 %v1457, %v1459
      %v1461 = vrot.slane %v1447, %v1460
      %v1462 = vcombine.high %v1454, %v1454
      %v1463 = vcombine.high %v1461, %v1461
      %v1464 = vcombine.high %v1442, %v1442
      %v1466 = vunpack.c.l.s4 1983009808
      %v1467 = vunpack.c.0.s8 %v1466
      %v1468 = vlaneseq
      %v1469 = vshrl.u32 %v1468, 7
      %v1470 = vsub.s32 %v1467, %v1469
      %v1471 = vrot.slane %v1442, %v1470
      %v1473 = vunpack.c.l.s4 1983009808
      %v1474 = vunpack.c.0.s8 %v1473
      %v1475 = vlaneseq
      %v1476 = vshrl.u32 %v1475, 7
      %v1477 = vsub.s32 %v1474, %v1476
      %v1478 = vrot.slane %v1464, %v1477
      %v1479 = vcombine.high %v1471, %v1471
      %v1480 = vcombine.high %v1478, %v1478
      %v1489 = vrot.slane %v1454, 7
      %v1490 = vrot.slane %v1489, 2
      %v1491 = vrot.slane %v1462, 7
      %v1492 = vrot.slane %v1491, 2
      %v1493 = vrot.slane %v1461, 7
      %v1494 = vrot.slane %v1493, 2
      %v1495 = vrot.slane %v1463, 7
      %v1496 = vrot.slane %v1495, 2
      %v1497 = vrot.slane %v1471, 7
      %v1498 = vrot.slane %v1497, 2
      %v1499 = vrot.slane %v1479, 7
      %v1500 = vrot.slane %v1499, 2
      %v1501 = vrot.slane %v1478, 7
      %v1502 = vrot.slane %v1501, 2
      %v1503 = vrot.slane %v1480, 7
      %v1504 = vrot.slane %v1503, 2
      %v1513 = vmax.f32 %v1454, %v1490
      %v1514 = vmax.f32 %v1462, %v1492
      %v1515 = vmax.f32 %v1461, %v1494
      %v1516 = vmax.f32 %v1463, %v1496
      %v1517 = vmax.f32 %v1471, %v1498
      %v1518 = vmax.f32 %v1479, %v1500
      %v1519 = vmax.f32 %v1478, %v1502
      %v1520 = vmax.f32 %v1480, %v1504
      %v1521 = vmax.f32 %v1513, %v1515
      %v1522 = vmax.f32 %v1514, %v1516
      %v1523 = vmax.f32 %v1517, %v1519
      %v1524 = vmax.f32 %v1518, %v1520
      %v1525 = vpack.c.bf16 %v1521, %v1521
      %v1526 = vpack.c.bf16 %v1522, %v1522
      %v1527 = vpack.c.bf16 %v1523, %v1523
      %v1528 = vpack.c.bf16 %v1524, %v1524
      %v1529 = vpack.c.bf16 %v1442, %v1439
      %v1534 = vunpack.c.l.b16 %v1525
      %v1535 = vunpack.c.l.b16 %v1526
      %v1536 = vunpack.c.l.b16 %v1527
      %v1537 = vunpack.c.l.b16 %v1528
      %v1538 = vrot.slane %v1535, 7
      %v1539 = vsel %vm1361, %v1538, %v1534
      %v1540 = vrot.slane %v1536, 6
      %v1541 = vsel %vm1364, %v1540, %v1539
      %v1542 = vrot.slane %v1537, 5
      %v1543 = vsel %vm1367, %v1542, %v1541
      %v1544 = vpack.c.b16 %v1543, %v1543
      %1545 = vrot.lane.b32.xlu0 %v1544, 126
      %v1546 = vpop.permute.xlu0 %1545
      %vm1547 = vcmask 15360
      %v1549 = vsel %vm1547, %v1529, 0
      %v1552 = vsel %vm1547, %v1546, 0
      %1554 = vmatprep.subr.bf16.mxu0 0
      %1555 = vmatpush1.bf16.xpose.msra.mxu0 %v1552
      %1556 = vmatprep.subr.bf16.mxu0 0
      %1557 = vmatpush1.bf16.xpose.msra.mxu0 0
      %1558 = vmatprep.subr.bf16.mxu0 0
      %1559 = vmatpush1.bf16.xpose.msra.mxu0 0
      %1560 = vmatprep.subr.bf16.mxu0 0
      %1561 = vmatpush1.bf16.xpose.msra.mxu0 0
      %1562 = vmatprep.subr.bf16.mxu0 0
      %1563 = vmatpush1.bf16.xpose.msra.mxu0 0
      %1564 = vmatprep.subr.bf16.mxu0 0
      %1565 = vmatpush1.bf16.xpose.msra.mxu0 0
      %1566 = vmatprep.subr.bf16.mxu0 0
      %1567 = vmatpush1.bf16.xpose.msra.mxu0 0
      %1568 = vmatprep.subr.bf16.mxu0 0
      %1569 = vmatpush1.bf16.xpose.msra.mxu0 0
      %1570 = vmatprep.subr.bf16.mxu0 0
      %1571 = vmatpush1.bf16.xpose.msra.mxu0 0
      %1572 = vmatprep.subr.bf16.mxu0 0
      %1573 = vmatpush1.bf16.xpose.msra.mxu0 0
      %1574 = vmatprep.subr.bf16.mxu0 0
      %1575 = vmatpush1.bf16.xpose.msra.mxu0 0
      %1576 = vmatprep.subr.bf16.mxu0 0
      %1577 = vmatpush1.bf16.xpose.msra.mxu0 0
      %1578 = vmatprep.subr.bf16.mxu0 0
      %1579 = vmatpush1.bf16.xpose.msra.mxu0 0
      %1580 = vmatprep.subr.bf16.mxu0 0
      %1581 = vmatpush1.bf16.xpose.msra.mxu0 0
      %1582 = vmatprep.subr.bf16.mxu0 0
      %1583 = vmatpush1.bf16.xpose.msra.mxu0 0
      %1584 = vmatprep.subr.bf16.mxu0 0
      %1585 = vmatpush1.bf16.xpose.msra.mxu0 0
      %1586 = vmatprep.mubr.bf16.mxu0 0
      %1587 = vmatmul.mubr.bf16.gmra.mrb[0].mxu0 %v1549
      %v1588 = vpop.f32.mrb[0].mxu0
      %v1589 = vadd.f32 0.0, %v1588
      %v1590 = vpop.f32.mrb[0].mxu0
      %v1591 = vpop.f32.mrb[0].mxu0
      %v1592 = vadd.f32 0.0, %v1591
      %v1593 = vpop.f32.mrb[0].mxu0
      %1594 = vdwg.mxu0
      %v1595 = vsel %vm1396, %v1589, -inf
      %1596 = vmax.xlane.f32.xlu0 %v1595
      %v1597 = vpop.xlane.xlu0 %1596
      %v1598 = vsel %vm1396, %v1592, -inf
      %1599 = vmax.xlane.f32.xlu0 %v1598
      %v1600 = vpop.xlane.xlu0 %1599
      %v1601 = vsub.f32 %v1589, %v1597
      %v1602 = vsub.f32 %v1592, %v1600
      %v1603 = vmul.f32 %v1601, 1.442695
      %v1604 = vpow.pop %v1603
      %v1605 = vmul.f32 %v1602, 1.442695
      %v1606 = vpow.pop %v1605
      %v1607 = vsel %vm1396, %v1604, 0.0
      %1608 = vadd.xlane.f32.xlu0 %v1607
      %v1609 = vpop.xlane.xlu0 %1608
      %v1610 = vsel %vm1396, %v1606, 0.0
      %1611 = vadd.xlane.f32.xlu0 %v1610
      %v1612 = vpop.xlane.xlu0 %1611
      %v1613 = vrcp.pop %v1609
      %v1614 = vrcp.pop %v1612
      %v1615 = vmul.f32 %v1604, %v1613
      %v1616 = vmul.f32 %v1606, %v1614
      %v1617 = vpack.c.bf16 %v1616, %v1615
      %1618 = vrot.lane.b32.xlu0 %v1544, 124
      %v1619 = vpop.permute.xlu0 %1618
      %v1621 = vsel %vm1396, %v1617, 0
      %v1624 = vsel %vm1400, %v1619, 0
      %1626 = vmatprep.subr.bf16.mxu0 0
      %1627 = vmatpush1.bf16.msra.mxu0 %v1624
      %1628 = vmatprep.subr.bf16.mxu0 0
      %1629 = vmatpush1.bf16.msra.mxu0 0
      %1630 = vmatprep.subr.bf16.mxu0 0
      %1631 = vmatpush1.bf16.msra.mxu0 0
      %1632 = vmatprep.subr.bf16.mxu0 0
      %1633 = vmatpush1.bf16.msra.mxu0 0
      %1634 = vmatprep.subr.bf16.mxu0 0
      %1635 = vmatpush1.bf16.msra.mxu0 0
      %1636 = vmatprep.subr.bf16.mxu0 0
      %1637 = vmatpush1.bf16.msra.mxu0 0
      %1638 = vmatprep.subr.bf16.mxu0 0
      %1639 = vmatpush1.bf16.msra.mxu0 0
      %1640 = vmatprep.subr.bf16.mxu0 0
      %1641 = vmatpush1.bf16.msra.mxu0 0
      %1642 = vmatprep.subr.bf16.mxu0 0
      %1643 = vmatpush1.bf16.msra.mxu0 0
      %1644 = vmatprep.subr.bf16.mxu0 0
      %1645 = vmatpush1.bf16.msra.mxu0 0
      %1646 = vmatprep.subr.bf16.mxu0 0
      %1647 = vmatpush1.bf16.msra.mxu0 0
      %1648 = vmatprep.subr.bf16.mxu0 0
      %1649 = vmatpush1.bf16.msra.mxu0 0
      %1650 = vmatprep.subr.bf16.mxu0 0
      %1651 = vmatpush1.bf16.msra.mxu0 0
      %1652 = vmatprep.subr.bf16.mxu0 0
      %1653 = vmatpush1.bf16.msra.mxu0 0
      %1654 = vmatprep.subr.bf16.mxu0 0
      %1655 = vmatpush1.bf16.msra.mxu0 0
      %1656 = vmatprep.subr.bf16.mxu0 0
      %1657 = vmatpush1.bf16.msra.mxu0 0
      %1658 = vmatprep.mubr.bf16.mxu0 0
      %1659 = vmatmul.mubr.bf16.gmra.mrb[0].mxu0 %v1621
      %v1660 = vpop.f32.mrb[0].mxu0
      %v1661 = vadd.f32 0.0, %v1660
      %v1662 = vpop.f32.mrb[0].mxu0
      %v1663 = vpop.f32.mrb[0].mxu0
      %v1664 = vadd.f32 0.0, %v1663
      %v1665 = vpop.f32.mrb[0].mxu0
      %1666 = vdwg.mxu0
      %v1667 = vpack.c.bf16 %v1664, %v1661
      %v1668 = vld [vmem:[%s3] sm:$0x1]
      %v1669 = vld [vmem:[%s4] sm:$0x1]
      %v1671 = vlaneseq
      %v1672 = vshrl.u32 %v1671, 7
      %v1673 = vsub.s32 0, %v1672
      %v1674 = vrot.slane %v1669, %v1673
      %v1677 = vsel %vm1547, %v1667, 0
      %vm1679 = vcmask 1040384
      %v1681 = vsel %vm1679, %v1668, 0
      %1683 = vmatprep.subr.bf16.mxu0 0
      %1684 = vmatpush1.bf16.msra.mxu0 %v1681
      %1685 = vmatprep.subr.bf16.mxu0 0
      %1686 = vmatpush1.bf16.msra.mxu0 0
      %1687 = vmatprep.subr.bf16.mxu0 0
      %1688 = vmatpush1.bf16.msra.mxu0 0
      %1689 = vmatprep.subr.bf16.mxu0 0
      %1690 = vmatpush1.bf16.msra.mxu0 0
      %1691 = vmatprep.subr.bf16.mxu0 0
      %1692 = vmatpush1.bf16.msra.mxu0 0
      %1693 = vmatprep.subr.bf16.mxu0 0
      %1694 = vmatpush1.bf16.msra.mxu0 0
      %1695 = vmatprep.subr.bf16.mxu0 0
      %1696 = vmatpush1.bf16.msra.mxu0 0
      %1697 = vmatprep.subr.bf16.mxu0 0
      %1698 = vmatpush1.bf16.msra.mxu0 0
      %1699 = vmatprep.subr.bf16.mxu0 0
      %1700 = vmatpush1.bf16.msra.mxu0 0
      %1701 = vmatprep.subr.bf16.mxu0 0
      %1702 = vmatpush1.bf16.msra.mxu0 0
      %1703 = vmatprep.subr.bf16.mxu0 0
      %1704 = vmatpush1.bf16.msra.mxu0 0
      %1705 = vmatprep.subr.bf16.mxu0 0
      %1706 = vmatpush1.bf16.msra.mxu0 0
      %1707 = vmatprep.subr.bf16.mxu0 0
      %1708 = vmatpush1.bf16.msra.mxu0 0
      %1709 = vmatprep.subr.bf16.mxu0 0
      %1710 = vmatpush1.bf16.msra.mxu0 0
      %1711 = vmatprep.subr.bf16.mxu0 0
      %1712 = vmatpush1.bf16.msra.mxu0 0
      %1713 = vmatprep.subr.bf16.mxu0 0
      %1714 = vmatpush1.bf16.msra.mxu0 0
      %1715 = vmatprep.mubr.bf16.mxu0 0
      %1716 = vmatmul.mubr.bf16.gmra.mrb[0].mxu0 %v1677
      %v1717 = vpop.f32.mrb[0].mxu0
      %v1718 = vadd.f32 %v1674, %v1717
      %v1719 = vpop.f32.mrb[0].mxu0
      %v1720 = vpop.f32.mrb[0].mxu0
      %v1721 = vadd.f32 %v1674, %v1720
      %v1722 = vpop.f32.mrb[0].mxu0
      %1723 = vdwg.mxu0
      %v1726 = vcombine.high %v1718, %v1718
      %v1727 = vcombine.high %v1721, %v1721
      %v1730 = vcombine.low %v1718, %v1721
      %v1732 = vunpack.c.l.s4 1983009808
      %v1733 = vunpack.c.0.s8 %v1732
      %v1734 = vlaneseq
      %v1735 = vshrl.u32 %v1734, 7
      %v1736 = vsub.s32 %v1733, %v1735
      %v1737 = vrot.slane %v1730, %v1736
      %v1738 = vcombine.low %v1726, %v1727
      %v1740 = vunpack.c.l.s4 1983009808
      %v1741 = vunpack.c.0.s8 %v1740
      %v1742 = vlaneseq
      %v1743 = vshrl.u32 %v1742, 7
      %v1744 = vsub.s32 %v1741, %v1743
      %v1745 = vrot.slane %v1738, %v1744
      %v1746 = vcombine.low %v1737, %v1745
      %v1747 = vcombine.high %v1737, %v1745
      %v1749 = vunpack.c.l.s4 1934713408
      %v1750 = vunpack.c.0.s8 %v1749
      %v1751 = vlaneseq
      %v1752 = vshrl.u32 %v1751, 7
      %v1753 = vsub.s32 %v1750, %v1752
      %v1754 = vrot.slane %v1746, %v1753
      %v1756 = vunpack.c.l.s4 1934713408
      %v1757 = vunpack.c.0.s8 %v1756
      %v1758 = vlaneseq
      %v1759 = vshrl.u32 %v1758, 7
      %v1760 = vsub.s32 %v1757, %v1759
      %v1761 = vrot.slane %v1747, %v1760
      %v1762 = vcombine.high %v1754, 0.0
      %v1763 = vcombine.high %v1761, 0.0
      %v1764 = vpack.c.bf16 %v1754, %v1754
      %v1765 = vpack.c.bf16 %v1762, %v1762
      %v1766 = vpack.c.bf16 %v1761, %v1761
      %v1767 = vpack.c.bf16 %v1763, %v1763
      %v1768 = vld [vmem:[%s5] sm:$0xf]
      %v1769 = vld [vmem:[%s5 + $0x4] sm:$0xf]
      %v1772 = vunpack.c.l.b16 %v1768
      %v1773 = vunpack.c.l.b16 %v1769
      %v1774 = vpack.c.b16 %v1773, %v1772
      %v1776 = vsel %vm1396, %v1774, 0
      %v1779 = vsel %vm1400, %v1764, 0
      %1781 = vmatprep.subr.bf16.mxu0 0
      %1782 = vmatpush1.bf16.msra.mxu0 %v1779
      %1783 = vmatprep.subr.bf16.mxu0 0
      %1784 = vmatpush1.bf16.msra.mxu0 0
      %1785 = vmatprep.subr.bf16.mxu0 0
      %1786 = vmatpush1.bf16.msra.mxu0 0
      %1787 = vmatprep.subr.bf16.mxu0 0
      %1788 = vmatpush1.bf16.msra.mxu0 0
      %1789 = vmatprep.subr.bf16.mxu0 0
      %1790 = vmatpush1.bf16.msra.mxu0 0
      %1791 = vmatprep.subr.bf16.mxu0 0
      %1792 = vmatpush1.bf16.msra.mxu0 0
      %1793 = vmatprep.subr.bf16.mxu0 0
      %1794 = vmatpush1.bf16.msra.mxu0 0
      %1795 = vmatprep.subr.bf16.mxu0 0
      %1796 = vmatpush1.bf16.msra.mxu0 0
      %1797 = vmatprep.subr.bf16.mxu0 0
      %1798 = vmatpush1.bf16.msra.mxu0 0
      %1799 = vmatprep.subr.bf16.mxu0 0
      %1800 = vmatpush1.bf16.msra.mxu0 0
      %1801 = vmatprep.subr.bf16.mxu0 0
      %1802 = vmatpush1.bf16.msra.mxu0 0
      %1803 = vmatprep.subr.bf16.mxu0 0
      %1804 = vmatpush1.bf16.msra.mxu0 0
      %1805 = vmatprep.subr.bf16.mxu0 0
      %1806 = vmatpush1.bf16.msra.mxu0 0
      %1807 = vmatprep.subr.bf16.mxu0 0
      %1808 = vmatpush1.bf16.msra.mxu0 0
      %1809 = vmatprep.subr.bf16.mxu0 0
      %1810 = vmatpush1.bf16.msra.mxu0 0
      %1811 = vmatprep.subr.bf16.mxu0 0
      %1812 = vmatpush1.bf16.msra.mxu0 0
      %1813 = vmatprep.mubr.bf16.mxu0 0
      %1814 = vmatmul.mubr.bf16.gmra.mrb[0].mxu0 %v1776
      %v1815 = vpop.f32.mrb[0].mxu0
      %v1816 = vadd.f32 0.0, %v1815
      %v1817 = vpop.f32.mrb[0].mxu0
      %v1818 = vpop.f32.mrb[0].mxu0
      %v1819 = vadd.f32 0.0, %v1818
      %v1820 = vpop.f32.mrb[0].mxu0
      %1821 = vdwg.mxu0
      %v1823 = vsel %vm1400, %v1765, 0
      %1825 = vmatprep.subr.bf16.mxu0 0
      %1826 = vmatpush1.bf16.msra.mxu0 %v1823
      %1827 = vmatprep.subr.bf16.mxu0 0
      %1828 = vmatpush1.bf16.msra.mxu0 0
      %1829 = vmatprep.subr.bf16.mxu0 0
      %1830 = vmatpush1.bf16.msra.mxu0 0
      %1831 = vmatprep.subr.bf16.mxu0 0
      %1832 = vmatpush1.bf16.msra.mxu0 0
      %1833 = vmatprep.subr.bf16.mxu0 0
      %1834 = vmatpush1.bf16.msra.mxu0 0
      %1835 = vmatprep.subr.bf16.mxu0 0
      %1836 = vmatpush1.bf16.msra.mxu0 0
      %1837 = vmatprep.subr.bf16.mxu0 0
      %1838 = vmatpush1.bf16.msra.mxu0 0
      %1839 = vmatprep.subr.bf16.mxu0 0
      %1840 = vmatpush1.bf16.msra.mxu0 0
      %1841 = vmatprep.subr.bf16.mxu0 0
      %1842 = vmatpush1.bf16.msra.mxu0 0
      %1843 = vmatprep.subr.bf16.mxu0 0
      %1844 = vmatpush1.bf16.msra.mxu0 0
      %1845 = vmatprep.subr.bf16.mxu0 0
      %1846 = vmatpush1.bf16.msra.mxu0 0
      %1847 = vmatprep.subr.bf16.mxu0 0
      %1848 = vmatpush1.bf16.msra.mxu0 0
      %1849 = vmatprep.subr.bf16.mxu0 0
      %1850 = vmatpush1.bf16.msra.mxu0 0
      %1851 = vmatprep.subr.bf16.mxu0 0
      %1852 = vmatpush1.bf16.msra.mxu0 0
      %1853 = vmatprep.subr.bf16.mxu0 0
      %1854 = vmatpush1.bf16.msra.mxu0 0
      %1855 = vmatprep.subr.bf16.mxu0 0
      %1856 = vmatpush1.bf16.msra.mxu0 0
      %1857 = vmatprep.mubr.bf16.mxu0 0
      %1858 = vmatmul.mubr.bf16.gmra.mrb[0].mxu0 %v1776
      %v1859 = vpop.f32.mrb[0].mxu0
      %v1860 = vadd.f32 0.0, %v1859
      %v1861 = vpop.f32.mrb[0].mxu0
      %v1862 = vpop.f32.mrb[0].mxu0
      %v1863 = vadd.f32 0.0, %v1862
      %v1864 = vpop.f32.mrb[0].mxu0
      %1865 = vdwg.mxu0
      %v1867 = vsel %vm1400, %v1766, 0
      %1869 = vmatprep.subr.bf16.mxu0 0
      %1870 = vmatpush1.bf16.msra.mxu0 %v1867
      %1871 = vmatprep.subr.bf16.mxu0 0
      %1872 = vmatpush1.bf16.msra.mxu0 0
      %1873 = vmatprep.subr.bf16.mxu0 0
      %1874 = vmatpush1.bf16.msra.mxu0 0
      %1875 = vmatprep.subr.bf16.mxu0 0
      %1876 = vmatpush1.bf16.msra.mxu0 0
      %1877 = vmatprep.subr.bf16.mxu0 0
      %1878 = vmatpush1.bf16.msra.mxu0 0
      %1879 = vmatprep.subr.bf16.mxu0 0
      %1880 = vmatpush1.bf16.msra.mxu0 0
      %1881 = vmatprep.subr.bf16.mxu0 0
      %1882 = vmatpush1.bf16.msra.mxu0 0
      %1883 = vmatprep.subr.bf16.mxu0 0
      %1884 = vmatpush1.bf16.msra.mxu0 0
      %1885 = vmatprep.subr.bf16.mxu0 0
      %1886 = vmatpush1.bf16.msra.mxu0 0
      %1887 = vmatprep.subr.bf16.mxu0 0
      %1888 = vmatpush1.bf16.msra.mxu0 0
      %1889 = vmatprep.subr.bf16.mxu0 0
      %1890 = vmatpush1.bf16.msra.mxu0 0
      %1891 = vmatprep.subr.bf16.mxu0 0
      %1892 = vmatpush1.bf16.msra.mxu0 0
      %1893 = vmatprep.subr.bf16.mxu0 0
      %1894 = vmatpush1.bf16.msra.mxu0 0
      %1895 = vmatprep.subr.bf16.mxu0 0
      %1896 = vmatpush1.bf16.msra.mxu0 0
      %1897 = vmatprep.subr.bf16.mxu0 0
      %1898 = vmatpush1.bf16.msra.mxu0 0
      %1899 = vmatprep.subr.bf16.mxu0 0
      %1900 = vmatpush1.bf16.msra.mxu0 0
      %1901 = vmatprep.mubr.bf16.mxu0 0
      %1902 = vmatmul.mubr.bf16.gmra.mrb[0].mxu0 %v1776
      %v1903 = vpop.f32.mrb[0].mxu0
      %v1904 = vadd.f32 0.0, %v1903
      %v1905 = vpop.f32.mrb[0].mxu0
      %v1906 = vpop.f32.mrb[0].mxu0
      %v1907 = vadd.f32 0.0, %v1906
      %v1908 = vpop.f32.mrb[0].mxu0
      %1909 = vdwg.mxu0
      %v1911 = vsel %vm1400, %v1767, 0
      %1913 = vmatprep.subr.bf16.mxu0 0
      %1914 = vmatpush1.bf16.msra.mxu0 %v1911
      %1915 = vmatprep.subr.bf16.mxu0 0
      %1916 = vmatpush1.bf16.msra.mxu0 0
      %1917 = vmatprep.subr.bf16.mxu0 0
      %1918 = vmatpush1.bf16.msra.mxu0 0
      %1919 = vmatprep.subr.bf16.mxu0 0
      %1920 = vmatpush1.bf16.msra.mxu0 0
      %1921 = vmatprep.subr.bf16.mxu0 0
      %1922 = vmatpush1.bf16.msra.mxu0 0
      %1923 = vmatprep.subr.bf16.mxu0 0
      %1924 = vmatpush1.bf16.msra.mxu0 0
      %1925 = vmatprep.subr.bf16.mxu0 0
      %1926 = vmatpush1.bf16.msra.mxu0 0
      %1927 = vmatprep.subr.bf16.mxu0 0
      %1928 = vmatpush1.bf16.msra.mxu0 0
      %1929 = vmatprep.subr.bf16.mxu0 0
      %1930 = vmatpush1.bf16.msra.mxu0 0
      %1931 = vmatprep.subr.bf16.mxu0 0
      %1932 = vmatpush1.bf16.msra.mxu0 0
      %1933 = vmatprep.subr.bf16.mxu0 0
      %1934 = vmatpush1.bf16.msra.mxu0 0
      %1935 = vmatprep.subr.bf16.mxu0 0
      %1936 = vmatpush1.bf16.msra.mxu0 0
      %1937 = vmatprep.subr.bf16.mxu0 0
      %1938 = vmatpush1.bf16.msra.mxu0 0
      %1939 = vmatprep.subr.bf16.mxu0 0
      %1940 = vmatpush1.bf16.msra.mxu0 0
      %1941 = vmatprep.subr.bf16.mxu0 0
      %1942 = vmatpush1.bf16.msra.mxu0 0
      %1943 = vmatprep.subr.bf16.mxu0 0
      %1944 = vmatpush1.bf16.msra.mxu0 0
      %1945 = vmatprep.mubr.bf16.mxu0 0
      %1946 = vmatmul.mubr.bf16.gmra.mrb[0].mxu0 %v1776
      %v1947 = vpop.f32.mrb[0].mxu0
      %v1948 = vadd.f32 0.0, %v1947
      %v1949 = vpop.f32.mrb[0].mxu0
      %v1950 = vpop.f32.mrb[0].mxu0
      %v1951 = vadd.f32 0.0, %v1950
      %v1952 = vpop.f32.mrb[0].mxu0
      %1953 = vdwg.mxu0
      %v1954 = vcombine.low %v1816, %v1904
      %v1955 = vcombine.high %v1816, %v1904
      %v1957 = vunpack.c.l.s4 1983009808
      %v1958 = vunpack.c.0.s8 %v1957
      %v1959 = vlaneseq
      %v1960 = vshrl.u32 %v1959, 7
      %v1961 = vsub.s32 %v1958, %v1960
      %v1962 = vrot.slane %v1954, %v1961
      %v1964 = vunpack.c.l.s4 1983009808
      %v1965 = vunpack.c.0.s8 %v1964
      %v1966 = vlaneseq
      %v1967 = vshrl.u32 %v1966, 7
      %v1968 = vsub.s32 %v1965, %v1967
      %v1969 = vrot.slane %v1955, %v1968
      %v1970 = vcombine.low %v1860, %v1948
      %v1971 = vcombine.high %v1860, %v1948
      %v1973 = vunpack.c.l.s4 1983009808
      %v1974 = vunpack.c.0.s8 %v1973
      %v1975 = vlaneseq
      %v1976 = vshrl.u32 %v1975, 7
      %v1977 = vsub.s32 %v1974, %v1976
      %v1978 = vrot.slane %v1970, %v1977
      %v1980 = vunpack.c.l.s4 1983009808
      %v1981 = vunpack.c.0.s8 %v1980
      %v1982 = vlaneseq
      %v1983 = vshrl.u32 %v1982, 7
      %v1984 = vsub.s32 %v1981, %v1983
      %v1985 = vrot.slane %v1971, %v1984
      %v1986 = vcombine.low %v1962, %v1978
      %v1987 = vcombine.high %v1962, %v1978
      %v1989 = vunpack.c.l.s4 1934713408
      %v1990 = vunpack.c.0.s8 %v1989
      %v1991 = vlaneseq
      %v1992 = vshrl.u32 %v1991, 7
      %v1993 = vsub.s32 %v1990, %v1992
      %v1994 = vrot.slane %v1986, %v1993
      %v1996 = vunpack.c.l.s4 1934713408
      %v1997 = vunpack.c.0.s8 %v1996
      %v1998 = vlaneseq
      %v1999 = vshrl.u32 %v1998, 7
      %v2000 = vsub.s32 %v1997, %v1999
      %v2001 = vrot.slane %v1987, %v2000
      %v2002 = vcombine.low %v1969, %v1985
      %v2003 = vcombine.high %v1969, %v1985
      %v2005 = vunpack.c.l.s4 1934713408
      %v2006 = vunpack.c.0.s8 %v2005
      %v2007 = vlaneseq
      %v2008 = vshrl.u32 %v2007, 7
      %v2009 = vsub.s32 %v2006, %v2008
      %v2010 = vrot.slane %v2002, %v2009
      %v2012 = vunpack.c.l.s4 1934713408
      %v2013 = vunpack.c.0.s8 %v2012
      %v2014 = vlaneseq
      %v2015 = vshrl.u32 %v2014, 7
      %v2016 = vsub.s32 %v2013, %v2015
      %v2017 = vrot.slane %v2003, %v2016
      %v2018 = vcombine.high %v1994, 0.0
      %v2019 = vcombine.high %v2001, 0.0
      %v2020 = vcombine.high %v2010, 0.0
      %v2021 = vcombine.high %v2017, 0.0
      %v2022 = vcombine.low %v1819, %v1907
      %v2023 = vcombine.high %v1819, %v1907
      %v2025 = vunpack.c.l.s4 1983009808
      %v2026 = vunpack.c.0.s8 %v2025
      %v2027 = vlaneseq
      %v2028 = vshrl.u32 %v2027, 7
      %v2029 = vsub.s32 %v2026, %v2028
      %v2030 = vrot.slane %v2022, %v2029
      %v2032 = vunpack.c.l.s4 1983009808
      %v2033 = vunpack.c.0.s8 %v2032
      %v2034 = vlaneseq
      %v2035 = vshrl.u32 %v2034, 7
      %v2036 = vsub.s32 %v2033, %v2035
      %v2037 = vrot.slane %v2023, %v2036
      %v2038 = vcombine.low %v1863, %v1951
      %v2039 = vcombine.high %v1863, %v1951
      %v2041 = vunpack.c.l.s4 1983009808
      %v2042 = vunpack.c.0.s8 %v2041
      %v2043 = vlaneseq
      %v2044 = vshrl.u32 %v2043, 7
      %v2045 = vsub.s32 %v2042, %v2044
      %v2046 = vrot.slane %v2038, %v2045
      %v2048 = vunpack.c.l.s4 1983009808
      %v2049 = vunpack.c.0.s8 %v2048
      %v2050 = vlaneseq
      %v2051 = vshrl.u32 %v2050, 7
      %v2052 = vsub.s32 %v2049, %v2051
      %v2053 = vrot.slane %v2039, %v2052
      %v2054 = vcombine.low %v2030, %v2046
      %v2055 = vcombine.high %v2030, %v2046
      %v2057 = vunpack.c.l.s4 1934713408
      %v2058 = vunpack.c.0.s8 %v2057
      %v2059 = vlaneseq
      %v2060 = vshrl.u32 %v2059, 7
      %v2061 = vsub.s32 %v2058, %v2060
      %v2062 = vrot.slane %v2054, %v2061
      %v2064 = vunpack.c.l.s4 1934713408
      %v2065 = vunpack.c.0.s8 %v2064
      %v2066 = vlaneseq
      %v2067 = vshrl.u32 %v2066, 7
      %v2068 = vsub.s32 %v2065, %v2067
      %v2069 = vrot.slane %v2055, %v2068
      %v2070 = vcombine.low %v2037, %v2053
      %v2071 = vcombine.high %v2037, %v2053
      %v2073 = vunpack.c.l.s4 1934713408
      %v2074 = vunpack.c.0.s8 %v2073
      %v2075 = vlaneseq
      %v2076 = vshrl.u32 %v2075, 7
      %v2077 = vsub.s32 %v2074, %v2076
      %v2078 = vrot.slane %v2070, %v2077
      %v2080 = vunpack.c.l.s4 1934713408
      %v2081 = vunpack.c.0.s8 %v2080
      %v2082 = vlaneseq
      %v2083 = vshrl.u32 %v2082, 7
      %v2084 = vsub.s32 %v2081, %v2083
      %v2085 = vrot.slane %v2071, %v2084
      %v2086 = vcombine.high %v2062, 0.0
      %v2087 = vcombine.high %v2069, 0.0
      %v2088 = vcombine.high %v2078, 0.0
      %v2089 = vcombine.high %v2085, 0.0
      %v2090 = vpack.c.bf16 %v1994, %v1994
      %v2091 = vpack.c.bf16 %v2018, %v2018
      %v2092 = vpack.c.bf16 %v2001, %v2001
      %v2093 = vpack.c.bf16 %v2019, %v2019
      %v2094 = vpack.c.bf16 %v2010, %v2010
      %v2095 = vpack.c.bf16 %v2020, %v2020
      %v2096 = vpack.c.bf16 %v2017, %v2017
      %v2097 = vpack.c.bf16 %v2021, %v2021
      %v2098 = vpack.c.bf16 %v2062, %v2062
      %v2099 = vpack.c.bf16 %v2086, %v2086
      %v2100 = vpack.c.bf16 %v2069, %v2069
      %v2101 = vpack.c.bf16 %v2087, %v2087
      %v2102 = vpack.c.bf16 %v2078, %v2078
      %v2103 = vpack.c.bf16 %v2088, %v2088
      %v2104 = vpack.c.bf16 %v2085, %v2085
      %v2105 = vpack.c.bf16 %v2089, %v2089
      %v2106 = vld [vmem:[%s6] sm:$0xf]
      %v2107 = vld [vmem:[%s6 + $0x4] sm:$0xf]
      %v2110 = vunpack.c.l.b16 %v2106
      %v2111 = vunpack.c.l.b16 %v2107
      %v2112 = vpack.c.b16 %v2111, %v2110
      %v2114 = vsel %vm1396, %v2112, 0
      %v2117 = vsel %vm1400, %v2090, 0
      %2119 = vmatprep.subr.bf16.mxu0 0
      %2120 = vmatpush1.bf16.msra.mxu0 %v2117
      %2121 = vmatprep.subr.bf16.mxu0 0
      %2122 = vmatpush1.bf16.msra.mxu0 0
      %2123 = vmatprep.subr.bf16.mxu0 0
      %2124 = vmatpush1.bf16.msra.mxu0 0
      %2125 = vmatprep.subr.bf16.mxu0 0
      %2126 = vmatpush1.bf16.msra.mxu0 0
      %2127 = vmatprep.subr.bf16.mxu0 0
      %2128 = vmatpush1.bf16.msra.mxu0 0
      %2129 = vmatprep.subr.bf16.mxu0 0
      %2130 = vmatpush1.bf16.msra.mxu0 0
      %2131 = vmatprep.subr.bf16.mxu0 0
      %2132 = vmatpush1.bf16.msra.mxu0 0
      %2133 = vmatprep.subr.bf16.mxu0 0
      %2134 = vmatpush1.bf16.msra.mxu0 0
      %2135 = vmatprep.subr.bf16.mxu0 0
      %2136 = vmatpush1.bf16.msra.mxu0 0
      %2137 = vmatprep.subr.bf16.mxu0 0
      %2138 = vmatpush1.bf16.msra.mxu0 0
      %2139 = vmatprep.subr.bf16.mxu0 0
      %2140 = vmatpush1.bf16.msra.mxu0 0
      %2141 = vmatprep.subr.bf16.mxu0 0
      %2142 = vmatpush1.bf16.msra.mxu0 0
      %2143 = vmatprep.subr.bf16.mxu0 0
      %2144 = vmatpush1.bf16.msra.mxu0 0
      %2145 = vmatprep.subr.bf16.mxu0 0
      %2146 = vmatpush1.bf16.msra.mxu0 0
      %2147 = vmatprep.subr.bf16.mxu0 0
      %2148 = vmatpush1.bf16.msra.mxu0 0
      %2149 = vmatprep.subr.bf16.mxu0 0
      %2150 = vmatpush1.bf16.msra.mxu0 0
      %2151 = vmatprep.mubr.bf16.mxu0 0
      %2152 = vmatmul.mubr.bf16.gmra.mrb[0].mxu0 %v2114
      %v2153 = vpop.f32.mrb[0].mxu0
      %v2154 = vadd.f32 0.0, %v2153
      %v2155 = vpop.f32.mrb[0].mxu0
      %v2156 = vpop.f32.mrb[0].mxu0
      %v2157 = vadd.f32 0.0, %v2156
      %v2158 = vpop.f32.mrb[0].mxu0
      %2159 = vdwg.mxu0
      %v2161 = vsel %vm1400, %v2091, 0
      %2163 = vmatprep.subr.bf16.mxu0 0
      %2164 = vmatpush1.bf16.msra.mxu0 %v2161
      %2165 = vmatprep.subr.bf16.mxu0 0
      %2166 = vmatpush1.bf16.msra.mxu0 0
      %2167 = vmatprep.subr.bf16.mxu0 0
      %2168 = vmatpush1.bf16.msra.mxu0 0
      %2169 = vmatprep.subr.bf16.mxu0 0
      %2170 = vmatpush1.bf16.msra.mxu0 0
      %2171 = vmatprep.subr.bf16.mxu0 0
      %2172 = vmatpush1.bf16.msra.mxu0 0
      %2173 = vmatprep.subr.bf16.mxu0 0
      %2174 = vmatpush1.bf16.msra.mxu0 0
      %2175 = vmatprep.subr.bf16.mxu0 0
      %2176 = vmatpush1.bf16.msra.mxu0 0
      %2177 = vmatprep.subr.bf16.mxu0 0
      %2178 = vmatpush1.bf16.msra.mxu0 0
      %2179 = vmatprep.subr.bf16.mxu0 0
      %2180 = vmatpush1.bf16.msra.mxu0 0
      %2181 = vmatprep.subr.bf16.mxu0 0
      %2182 = vmatpush1.bf16.msra.mxu0 0
      %2183 = vmatprep.subr.bf16.mxu0 0
      %2184 = vmatpush1.bf16.msra.mxu0 0
      %2185 = vmatprep.subr.bf16.mxu0 0
      %2186 = vmatpush1.bf16.msra.mxu0 0
      %2187 = vmatprep.subr.bf16.mxu0 0
      %2188 = vmatpush1.bf16.msra.mxu0 0
      %2189 = vmatprep.subr.bf16.mxu0 0
      %2190 = vmatpush1.bf16.msra.mxu0 0
      %2191 = vmatprep.subr.bf16.mxu0 0
      %2192 = vmatpush1.bf16.msra.mxu0 0
      %2193 = vmatprep.subr.bf16.mxu0 0
      %2194 = vmatpush1.bf16.msra.mxu0 0
      %2195 = vmatprep.mubr.bf16.mxu0 0
      %2196 = vmatmul.mubr.bf16.gmra.mrb[0].mxu0 %v2114
      %v2197 = vpop.f32.mrb[0].mxu0
      %v2198 = vadd.f32 0.0, %v2197
      %v2199 = vpop.f32.mrb[0].mxu0
      %v2200 = vpop.f32.mrb[0].mxu0
      %v2201 = vadd.f32 0.0, %v2200
      %v2202 = vpop.f32.mrb[0].mxu0
      %2203 = vdwg.mxu0
      %v2205 = vsel %vm1400, %v2092, 0
      %2207 = vmatprep.subr.bf16.mxu0 0
      %2208 = vmatpush1.bf16.msra.mxu0 %v2205
      %2209 = vmatprep.subr.bf16.mxu0 0
      %2210 = vmatpush1.bf16.msra.mxu0 0
      %2211 = vmatprep.subr.bf16.mxu0 0
      %2212 = vmatpush1.bf16.msra.mxu0 0
      %2213 = vmatprep.subr.bf16.mxu0 0
      %2214 = vmatpush1.bf16.msra.mxu0 0
      %2215 = vmatprep.subr.bf16.mxu0 0
      %2216 = vmatpush1.bf16.msra.mxu0 0
      %2217 = vmatprep.subr.bf16.mxu0 0
      %2218 = vmatpush1.bf16.msra.mxu0 0
      %2219 = vmatprep.subr.bf16.mxu0 0
      %2220 = vmatpush1.bf16.msra.mxu0 0
      %2221 = vmatprep.subr.bf16.mxu0 0
      %2222 = vmatpush1.bf16.msra.mxu0 0
      %2223 = vmatprep.subr.bf16.mxu0 0
      %2224 = vmatpush1.bf16.msra.mxu0 0
      %2225 = vmatprep.subr.bf16.mxu0 0
      %2226 = vmatpush1.bf16.msra.mxu0 0
      %2227 = vmatprep.subr.bf16.mxu0 0
      %2228 = vmatpush1.bf16.msra.mxu0 0
      %2229 = vmatprep.subr.bf16.mxu0 0
      %2230 = vmatpush1.bf16.msra.mxu0 0
      %2231 = vmatprep.subr.bf16.mxu0 0
      %2232 = vmatpush1.bf16.msra.mxu0 0
      %2233 = vmatprep.subr.bf16.mxu0 0
      %2234 = vmatpush1.bf16.msra.mxu0 0
      %2235 = vmatprep.subr.bf16.mxu0 0
      %2236 = vmatpush1.bf16.msra.mxu0 0
      %2237 = vmatprep.subr.bf16.mxu0 0
      %2238 = vmatpush1.bf16.msra.mxu0 0
      %2239 = vmatprep.mubr.bf16.mxu0 0
      %2240 = vmatmul.mubr.bf16.gmra.mrb[0].mxu0 %v2114
      %v2241 = vpop.f32.mrb[0].mxu0
      %v2242 = vadd.f32 0.0, %v2241
      %v2243 = vpop.f32.mrb[0].mxu0
      %v2244 = vpop.f32.mrb[0].mxu0
      %v2245 = vadd.f32 0.0, %v2244
      %v2246 = vpop.f32.mrb[0].mxu0
      %2247 = vdwg.mxu0
      %v2249 = vsel %vm1400, %v2093, 0
      %2251 = vmatprep.subr.bf16.mxu0 0
      %2252 = vmatpush1.bf16.msra.mxu0 %v2249
      %2253 = vmatprep.subr.bf16.mxu0 0
      %2254 = vmatpush1.bf16.msra.mxu0 0
      %2255 = vmatprep.subr.bf16.mxu0 0
      %2256 = vmatpush1.bf16.msra.mxu0 0
      %2257 = vmatprep.subr.bf16.mxu0 0
      %2258 = vmatpush1.bf16.msra.mxu0 0
      %2259 = vmatprep.subr.bf16.mxu0 0
      %2260 = vmatpush1.bf16.msra.mxu0 0
      %2261 = vmatprep.subr.bf16.mxu0 0
      %2262 = vmatpush1.bf16.msra.mxu0 0
      %2263 = vmatprep.subr.bf16.mxu0 0
      %2264 = vmatpush1.bf16.msra.mxu0 0
      %2265 = vmatprep.subr.bf16.mxu0 0
      %2266 = vmatpush1.bf16.msra.mxu0 0
      %2267 = vmatprep.subr.bf16.mxu0 0
      %2268 = vmatpush1.bf16.msra.mxu0 0
      %2269 = vmatprep.subr.bf16.mxu0 0
      %2270 = vmatpush1.bf16.msra.mxu0 0
      %2271 = vmatprep.subr.bf16.mxu0 0
      %2272 = vmatpush1.bf16.msra.mxu0 0
      %2273 = vmatprep.subr.bf16.mxu0 0
      %2274 = vmatpush1.bf16.msra.mxu0 0
      %2275 = vmatprep.subr.bf16.mxu0 0
      %2276 = vmatpush1.bf16.msra.mxu0 0
      %2277 = vmatprep.subr.bf16.mxu0 0
      %2278 = vmatpush1.bf16.msra.mxu0 0
      %2279 = vmatprep.subr.bf16.mxu0 0
      %2280 = vmatpush1.bf16.msra.mxu0 0
      %2281 = vmatprep.subr.bf16.mxu0 0
      %2282 = vmatpush1.bf16.msra.mxu0 0
      %2283 = vmatprep.mubr.bf16.mxu0 0
      %2284 = vmatmul.mubr.bf16.gmra.mrb[0].mxu0 %v2114
      %v2285 = vpop.f32.mrb[0].mxu0
      %v2286 = vadd.f32 0.0, %v2285
      %v2287 = vpop.f32.mrb[0].mxu0
      %v2288 = vpop.f32.mrb[0].mxu0
      %v2289 = vadd.f32 0.0, %v2288
      %v2290 = vpop.f32.mrb[0].mxu0
      %2291 = vdwg.mxu0
      %v2293 = vsel %vm1400, %v2094, 0
      %2295 = vmatprep.subr.bf16.mxu0 0
      %2296 = vmatpush1.bf16.msra.mxu0 %v2293
      %2297 = vmatprep.subr.bf16.mxu0 0
      %2298 = vmatpush1.bf16.msra.mxu0 0
      %2299 = vmatprep.subr.bf16.mxu0 0
      %2300 = vmatpush1.bf16.msra.mxu0 0
      %2301 = vmatprep.subr.bf16.mxu0 0
      %2302 = vmatpush1.bf16.msra.mxu0 0
      %2303 = vmatprep.subr.bf16.mxu0 0
      %2304 = vmatpush1.bf16.msra.mxu0 0
      %2305 = vmatprep.subr.bf16.mxu0 0
      %2306 = vmatpush1.bf16.msra.mxu0 0
      %2307 = vmatprep.subr.bf16.mxu0 0
      %2308 = vmatpush1.bf16.msra.mxu0 0
      %2309 = vmatprep.subr.bf16.mxu0 0
      %2310 = vmatpush1.bf16.msra.mxu0 0
      %2311 = vmatprep.subr.bf16.mxu0 0
      %2312 = vmatpush1.bf16.msra.mxu0 0
      %2313 = vmatprep.subr.bf16.mxu0 0
      %2314 = vmatpush1.bf16.msra.mxu0 0
      %2315 = vmatprep.subr.bf16.mxu0 0
      %2316 = vmatpush1.bf16.msra.mxu0 0
      %2317 = vmatprep.subr.bf16.mxu0 0
      %2318 = vmatpush1.bf16.msra.mxu0 0
      %2319 = vmatprep.subr.bf16.mxu0 0
      %2320 = vmatpush1.bf16.msra.mxu0 0
      %2321 = vmatprep.subr.bf16.mxu0 0
      %2322 = vmatpush1.bf16.msra.mxu0 0
      %2323 = vmatprep.subr.bf16.mxu0 0
      %2324 = vmatpush1.bf16.msra.mxu0 0
      %2325 = vmatprep.subr.bf16.mxu0 0
      %2326 = vmatpush1.bf16.msra.mxu0 0
      %2327 = vmatprep.mubr.bf16.mxu0 0
      %2328 = vmatmul.mubr.bf16.gmra.mrb[0].mxu0 %v2114
      %v2329 = vpop.f32.mrb[0].mxu0
      %v2330 = vadd.f32 0.0, %v2329
      %v2331 = vpop.f32.mrb[0].mxu0
      %v2332 = vpop.f32.mrb[0].mxu0
      %v2333 = vadd.f32 0.0, %v2332
      %v2334 = vpop.f32.mrb[0].mxu0
      %2335 = vdwg.mxu0
      %v2337 = vsel %vm1400, %v2095, 0
      %2339 = vmatprep.subr.bf16.mxu0 0
      %2340 = vmatpush1.bf16.msra.mxu0 %v2337
      %2341 = vmatprep.subr.bf16.mxu0 0
      %2342 = vmatpush1.bf16.msra.mxu0 0
      %2343 = vmatprep.subr.bf16.mxu0 0
      %2344 = vmatpush1.bf16.msra.mxu0 0
      %2345 = vmatprep.subr.bf16.mxu0 0
      %2346 = vmatpush1.bf16.msra.mxu0 0
      %2347 = vmatprep.subr.bf16.mxu0 0
      %2348 = vmatpush1.bf16.msra.mxu0 0
      %2349 = vmatprep.subr.bf16.mxu0 0
      %2350 = vmatpush1.bf16.msra.mxu0 0
      %2351 = vmatprep.subr.bf16.mxu0 0
      %2352 = vmatpush1.bf16.msra.mxu0 0
      %2353 = vmatprep.subr.bf16.mxu0 0
      %2354 = vmatpush1.bf16.msra.mxu0 0
      %2355 = vmatprep.subr.bf16.mxu0 0
      %2356 = vmatpush1.bf16.msra.mxu0 0
      %2357 = vmatprep.subr.bf16.mxu0 0
      %2358 = vmatpush1.bf16.msra.mxu0 0
      %2359 = vmatprep.subr.bf16.mxu0 0
      %2360 = vmatpush1.bf16.msra.mxu0 0
      %2361 = vmatprep.subr.bf16.mxu0 0
      %2362 = vmatpush1.bf16.msra.mxu0 0
      %2363 = vmatprep.subr.bf16.mxu0 0
      %2364 = vmatpush1.bf16.msra.mxu0 0
      %2365 = vmatprep.subr.bf16.mxu0 0
      %2366 = vmatpush1.bf16.msra.mxu0 0
      %2367 = vmatprep.subr.bf16.mxu0 0
      %2368 = vmatpush1.bf16.msra.mxu0 0
      %2369 = vmatprep.subr.bf16.mxu0 0
      %2370 = vmatpush1.bf16.msra.mxu0 0
      %2371 = vmatprep.mubr.bf16.mxu0 0
      %2372 = vmatmul.mubr.bf16.gmra.mrb[0].mxu0 %v2114
      %v2373 = vpop.f32.mrb[0].mxu0
      %v2374 = vadd.f32 0.0, %v2373
      %v2375 = vpop.f32.mrb[0].mxu0
      %v2376 = vpop.f32.mrb[0].mxu0
      %v2377 = vadd.f32 0.0, %v2376
      %v2378 = vpop.f32.mrb[0].mxu0
      %2379 = vdwg.mxu0
      %v2381 = vsel %vm1400, %v2096, 0
      %2383 = vmatprep.subr.bf16.mxu0 0
      %2384 = vmatpush1.bf16.msra.mxu0 %v2381
      %2385 = vmatprep.subr.bf16.mxu0 0
      %2386 = vmatpush1.bf16.msra.mxu0 0
      %2387 = vmatprep.subr.bf16.mxu0 0
      %2388 = vmatpush1.bf16.msra.mxu0 0
      %2389 = vmatprep.subr.bf16.mxu0 0
      %2390 = vmatpush1.bf16.msra.mxu0 0
      %2391 = vmatprep.subr.bf16.mxu0 0
      %2392 = vmatpush1.bf16.msra.mxu0 0
      %2393 = vmatprep.subr.bf16.mxu0 0
      %2394 = vmatpush1.bf16.msra.mxu0 0
      %2395 = vmatprep.subr.bf16.mxu0 0
      %2396 = vmatpush1.bf16.msra.mxu0 0
      %2397 = vmatprep.subr.bf16.mxu0 0
      %2398 = vmatpush1.bf16.msra.mxu0 0
      %2399 = vmatprep.subr.bf16.mxu0 0
      %2400 = vmatpush1.bf16.msra.mxu0 0
      %2401 = vmatprep.subr.bf16.mxu0 0
      %2402 = vmatpush1.bf16.msra.mxu0 0
      %2403 = vmatprep.subr.bf16.mxu0 0
      %2404 = vmatpush1.bf16.msra.mxu0 0
      %2405 = vmatprep.subr.bf16.mxu0 0
      %2406 = vmatpush1.bf16.msra.mxu0 0
      %2407 = vmatprep.subr.bf16.mxu0 0
      %2408 = vmatpush1.bf16.msra.mxu0 0
      %2409 = vmatprep.subr.bf16.mxu0 0
      %2410 = vmatpush1.bf16.msra.mxu0 0
      %2411 = vmatprep.subr.bf16.mxu0 0
      %2412 = vmatpush1.bf16.msra.mxu0 0
      %2413 = vmatprep.subr.bf16.mxu0 0
      %2414 = vmatpush1.bf16.msra.mxu0 0
      %2415 = vmatprep.mubr.bf16.mxu0 0
      %2416 = vmatmul.mubr.bf16.gmra.mrb[0].mxu0 %v2114
      %v2417 = vpop.f32.mrb[0].mxu0
      %v2418 = vadd.f32 0.0, %v2417
      %v2419 = vpop.f32.mrb[0].mxu0
      %v2420 = vpop.f32.mrb[0].mxu0
      %v2421 = vadd.f32 0.0, %v2420
      %v2422 = vpop.f32.mrb[0].mxu0
      %2423 = vdwg.mxu0
      %v2425 = vsel %vm1400, %v2097, 0
      %2427 = vmatprep.subr.bf16.mxu0 0
      %2428 = vmatpush1.bf16.msra.mxu0 %v2425
      %2429 = vmatprep.subr.bf16.mxu0 0
      %2430 = vmatpush1.bf16.msra.mxu0 0
      %2431 = vmatprep.subr.bf16.mxu0 0
      %2432 = vmatpush1.bf16.msra.mxu0 0
      %2433 = vmatprep.subr.bf16.mxu0 0
      %2434 = vmatpush1.bf16.msra.mxu0 0
      %2435 = vmatprep.subr.bf16.mxu0 0
      %2436 = vmatpush1.bf16.msra.mxu0 0
      %2437 = vmatprep.subr.bf16.mxu0 0
      %2438 = vmatpush1.bf16.msra.mxu0 0
      %2439 = vmatprep.subr.bf16.mxu0 0
      %2440 = vmatpush1.bf16.msra.mxu0 0
      %2441 = vmatprep.subr.bf16.mxu0 0
      %2442 = vmatpush1.bf16.msra.mxu0 0
      %2443 = vmatprep.subr.bf16.mxu0 0
      %2444 = vmatpush1.bf16.msra.mxu0 0
      %2445 = vmatprep.subr.bf16.mxu0 0
      %2446 = vmatpush1.bf16.msra.mxu0 0
      %2447 = vmatprep.subr.bf16.mxu0 0
      %2448 = vmatpush1.bf16.msra.mxu0 0
      %2449 = vmatprep.subr.bf16.mxu0 0
      %2450 = vmatpush1.bf16.msra.mxu0 0
      %2451 = vmatprep.subr.bf16.mxu0 0
      %2452 = vmatpush1.bf16.msra.mxu0 0
      %2453 = vmatprep.subr.bf16.mxu0 0
      %2454 = vmatpush1.bf16.msra.mxu0 0
      %2455 = vmatprep.subr.bf16.mxu0 0
      %2456 = vmatpush1.bf16.msra.mxu0 0
      %2457 = vmatprep.subr.bf16.mxu0 0
      %2458 = vmatpush1.bf16.msra.mxu0 0
      %2459 = vmatprep.mubr.bf16.mxu0 0
      %2460 = vmatmul.mubr.bf16.gmra.mrb[0].mxu0 %v2114
      %v2461 = vpop.f32.mrb[0].mxu0
      %v2462 = vadd.f32 0.0, %v2461
      %v2463 = vpop.f32.mrb[0].mxu0
      %v2464 = vpop.f32.mrb[0].mxu0
      %v2465 = vadd.f32 0.0, %v2464
      %v2466 = vpop.f32.mrb[0].mxu0
      %2467 = vdwg.mxu0
      %v2469 = vsel %vm1400, %v2098, 0
      %2471 = vmatprep.subr.bf16.mxu0 0
      %2472 = vmatpush1.bf16.msra.mxu0 %v2469
      %2473 = vmatprep.subr.bf16.mxu0 0
      %2474 = vmatpush1.bf16.msra.mxu0 0
      %2475 = vmatprep.subr.bf16.mxu0 0
      %2476 = vmatpush1.bf16.msra.mxu0 0
      %2477 = vmatprep.subr.bf16.mxu0 0
      %2478 = vmatpush1.bf16.msra.mxu0 0
      %2479 = vmatprep.subr.bf16.mxu0 0
      %2480 = vmatpush1.bf16.msra.mxu0 0
      %2481 = vmatprep.subr.bf16.mxu0 0
      %2482 = vmatpush1.bf16.msra.mxu0 0
      %2483 = vmatprep.subr.bf16.mxu0 0
      %2484 = vmatpush1.bf16.msra.mxu0 0
      %2485 = vmatprep.subr.bf16.mxu0 0
      %2486 = vmatpush1.bf16.msra.mxu0 0
      %2487 = vmatprep.subr.bf16.mxu0 0
      %2488 = vmatpush1.bf16.msra.mxu0 0
      %2489 = vmatprep.subr.bf16.mxu0 0
      %2490 = vmatpush1.bf16.msra.mxu0 0
      %2491 = vmatprep.subr.bf16.mxu0 0
      %2492 = vmatpush1.bf16.msra.mxu0 0
      %2493 = vmatprep.subr.bf16.mxu0 0
      %2494 = vmatpush1.bf16.msra.mxu0 0
      %2495 = vmatprep.subr.bf16.mxu0 0
      %2496 = vmatpush1.bf16.msra.mxu0 0
      %2497 = vmatprep.subr.bf16.mxu0 0
      %2498 = vmatpush1.bf16.msra.mxu0 0
      %2499 = vmatprep.subr.bf16.mxu0 0
      %2500 = vmatpush1.bf16.msra.mxu0 0
      %2501 = vmatprep.subr.bf16.mxu0 0
      %2502 = vmatpush1.bf16.msra.mxu0 0
      %2503 = vmatprep.mubr.bf16.mxu0 0
      %2504 = vmatmul.mubr.bf16.gmra.mrb[0].mxu0 %v2114
      %v2505 = vpop.f32.mrb[0].mxu0
      %v2506 = vadd.f32 0.0, %v2505
      %v2507 = vpop.f32.mrb[0].mxu0
      %v2508 = vpop.f32.mrb[0].mxu0
      %v2509 = vadd.f32 0.0, %v2508
      %v2510 = vpop.f32.mrb[0].mxu0
      %2511 = vdwg.mxu0
      %v2513 = vsel %vm1400, %v2099, 0
      %2515 = vmatprep.subr.bf16.mxu0 0
      %2516 = vmatpush1.bf16.msra.mxu0 %v2513
      %2517 = vmatprep.subr.bf16.mxu0 0
      %2518 = vmatpush1.bf16.msra.mxu0 0
      %2519 = vmatprep.subr.bf16.mxu0 0
      %2520 = vmatpush1.bf16.msra.mxu0 0
      %2521 = vmatprep.subr.bf16.mxu0 0
      %2522 = vmatpush1.bf16.msra.mxu0 0
      %2523 = vmatprep.subr.bf16.mxu0 0
      %2524 = vmatpush1.bf16.msra.mxu0 0
      %2525 = vmatprep.subr.bf16.mxu0 0
      %2526 = vmatpush1.bf16.msra.mxu0 0
      %2527 = vmatprep.subr.bf16.mxu0 0
      %2528 = vmatpush1.bf16.msra.mxu0 0
      %2529 = vmatprep.subr.bf16.mxu0 0
      %2530 = vmatpush1.bf16.msra.mxu0 0
      %2531 = vmatprep.subr.bf16.mxu0 0
      %2532 = vmatpush1.bf16.msra.mxu0 0
      %2533 = vmatprep.subr.bf16.mxu0 0
      %2534 = vmatpush1.bf16.msra.mxu0 0
      %2535 = vmatprep.subr.bf16.mxu0 0
      %2536 = vmatpush1.bf16.msra.mxu0 0
      %2537 = vmatprep.subr.bf16.mxu0 0
      %2538 = vmatpush1.bf16.msra.mxu0 0
      %2539 = vmatprep.subr.bf16.mxu0 0
      %2540 = vmatpush1.bf16.msra.mxu0 0
      %2541 = vmatprep.subr.bf16.mxu0 0
      %2542 = vmatpush1.bf16.msra.mxu0 0
      %2543 = vmatprep.subr.bf16.mxu0 0
      %2544 = vmatpush1.bf16.msra.mxu0 0
      %2545 = vmatprep.subr.bf16.mxu0 0
      %2546 = vmatpush1.bf16.msra.mxu0 0
      %2547 = vmatprep.mubr.bf16.mxu0 0
      %2548 = vmatmul.mubr.bf16.gmra.mrb[0].mxu0 %v2114
      %v2549 = vpop.f32.mrb[0].mxu0
      %v2550 = vadd.f32 0.0, %v2549
      %v2551 = vpop.f32.mrb[0].mxu0
      %v2552 = vpop.f32.mrb[0].mxu0
      %v2553 = vadd.f32 0.0, %v2552
      %v2554 = vpop.f32.mrb[0].mxu0
      %2555 = vdwg.mxu0
      %v2557 = vsel %vm1400, %v2100, 0
      %2559 = vmatprep.subr.bf16.mxu0 0
      %2560 = vmatpush1.bf16.msra.mxu0 %v2557
      %2561 = vmatprep.subr.bf16.mxu0 0
      %2562 = vmatpush1.bf16.msra.mxu0 0
      %2563 = vmatprep.subr.bf16.mxu0 0
      %2564 = vmatpush1.bf16.msra.mxu0 0
      %2565 = vmatprep.subr.bf16.mxu0 0
      %2566 = vmatpush1.bf16.msra.mxu0 0
      %2567 = vmatprep.subr.bf16.mxu0 0
      %2568 = vmatpush1.bf16.msra.mxu0 0
      %2569 = vmatprep.subr.bf16.mxu0 0
      %2570 = vmatpush1.bf16.msra.mxu0 0
      %2571 = vmatprep.subr.bf16.mxu0 0
      %2572 = vmatpush1.bf16.msra.mxu0 0
      %2573 = vmatprep.subr.bf16.mxu0 0
      %2574 = vmatpush1.bf16.msra.mxu0 0
      %2575 = vmatprep.subr.bf16.mxu0 0
      %2576 = vmatpush1.bf16.msra.mxu0 0
      %2577 = vmatprep.subr.bf16.mxu0 0
      %2578 = vmatpush1.bf16.msra.mxu0 0
      %2579 = vmatprep.subr.bf16.mxu0 0
      %2580 = vmatpush1.bf16.msra.mxu0 0
      %2581 = vmatprep.subr.bf16.mxu0 0
      %2582 = vmatpush1.bf16.msra.mxu0 0
      %2583 = vmatprep.subr.bf16.mxu0 0
      %2584 = vmatpush1.bf16.msra.mxu0 0
      %2585 = vmatprep.subr.bf16.mxu0 0
      %2586 = vmatpush1.bf16.msra.mxu0 0
      %2587 = vmatprep.subr.bf16.mxu0 0
      %2588 = vmatpush1.bf16.msra.mxu0 0
      %2589 = vmatprep.subr.bf16.mxu0 0
      %2590 = vmatpush1.bf16.msra.mxu0 0
      %2591 = vmatprep.mubr.bf16.mxu0 0
      %2592 = vmatmul.mubr.bf16.gmra.mrb[0].mxu0 %v2114
      %v2593 = vpop.f32.mrb[0].mxu0
      %v2594 = vadd.f32 0.0, %v2593
      %v2595 = vpop.f32.mrb[0].mxu0
      %v2596 = vpop.f32.mrb[0].mxu0
      %v2597 = vadd.f32 0.0, %v2596
      %v2598 = vpop.f32.mrb[0].mxu0
      %2599 = vdwg.mxu0
      %v2601 = vsel %vm1400, %v2101, 0
      %2603 = vmatprep.subr.bf16.mxu0 0
      %2604 = vmatpush1.bf16.msra.mxu0 %v2601
      %2605 = vmatprep.subr.bf16.mxu0 0
      %2606 = vmatpush1.bf16.msra.mxu0 0
      %2607 = vmatprep.subr.bf16.mxu0 0
      %2608 = vmatpush1.bf16.msra.mxu0 0
      %2609 = vmatprep.subr.bf16.mxu0 0
      %2610 = vmatpush1.bf16.msra.mxu0 0
      %2611 = vmatprep.subr.bf16.mxu0 0
      %2612 = vmatpush1.bf16.msra.mxu0 0
      %2613 = vmatprep.subr.bf16.mxu0 0
      %2614 = vmatpush1.bf16.msra.mxu0 0
      %2615 = vmatprep.subr.bf16.mxu0 0
      %2616 = vmatpush1.bf16.msra.mxu0 0
      %2617 = vmatprep.subr.bf16.mxu0 0
      %2618 = vmatpush1.bf16.msra.mxu0 0
      %2619 = vmatprep.subr.bf16.mxu0 0
      %2620 = vmatpush1.bf16.msra.mxu0 0
      %2621 = vmatprep.subr.bf16.mxu0 0
      %2622 = vmatpush1.bf16.msra.mxu0 0
      %2623 = vmatprep.subr.bf16.mxu0 0
      %2624 = vmatpush1.bf16.msra.mxu0 0
      %2625 = vmatprep.subr.bf16.mxu0 0
      %2626 = vmatpush1.bf16.msra.mxu0 0
      %2627 = vmatprep.subr.bf16.mxu0 0
      %2628 = vmatpush1.bf16.msra.mxu0 0
      %2629 = vmatprep.subr.bf16.mxu0 0
      %2630 = vmatpush1.bf16.msra.mxu0 0
      %2631 = vmatprep.subr.bf16.mxu0 0
      %2632 = vmatpush1.bf16.msra.mxu0 0
      %2633 = vmatprep.subr.bf16.mxu0 0
      %2634 = vmatpush1.bf16.msra.mxu0 0
      %2635 = vmatprep.mubr.bf16.mxu0 0
      %2636 = vmatmul.mubr.bf16.gmra.mrb[0].mxu0 %v2114
      %v2637 = vpop.f32.mrb[0].mxu0
      %v2638 = vadd.f32 0.0, %v2637
      %v2639 = vpop.f32.mrb[0].mxu0
      %v2640 = vpop.f32.mrb[0].mxu0
      %v2641 = vadd.f32 0.0, %v2640
      %v2642 = vpop.f32.mrb[0].mxu0
      %2643 = vdwg.mxu0
      %v2645 = vsel %vm1400, %v2102, 0
      %2647 = vmatprep.subr.bf16.mxu0 0
      %2648 = vmatpush1.bf16.msra.mxu0 %v2645
      %2649 = vmatprep.subr.bf16.mxu0 0
      %2650 = vmatpush1.bf16.msra.mxu0 0
      %2651 = vmatprep.subr.bf16.mxu0 0
      %2652 = vmatpush1.bf16.msra.mxu0 0
      %2653 = vmatprep.subr.bf16.mxu0 0
      %2654 = vmatpush1.bf16.msra.mxu0 0
      %2655 = vmatprep.subr.bf16.mxu0 0
      %2656 = vmatpush1.bf16.msra.mxu0 0
      %2657 = vmatprep.subr.bf16.mxu0 0
      %2658 = vmatpush1.bf16.msra.mxu0 0
      %2659 = vmatprep.subr.bf16.mxu0 0
      %2660 = vmatpush1.bf16.msra.mxu0 0
      %2661 = vmatprep.subr.bf16.mxu0 0
      %2662 = vmatpush1.bf16.msra.mxu0 0
      %2663 = vmatprep.subr.bf16.mxu0 0
      %2664 = vmatpush1.bf16.msra.mxu0 0
      %2665 = vmatprep.subr.bf16.mxu0 0
      %2666 = vmatpush1.bf16.msra.mxu0 0
      %2667 = vmatprep.subr.bf16.mxu0 0
      %2668 = vmatpush1.bf16.msra.mxu0 0
      %2669 = vmatprep.subr.bf16.mxu0 0
      %2670 = vmatpush1.bf16.msra.mxu0 0
      %2671 = vmatprep.subr.bf16.mxu0 0
      %2672 = vmatpush1.bf16.msra.mxu0 0
      %2673 = vmatprep.subr.bf16.mxu0 0
      %2674 = vmatpush1.bf16.msra.mxu0 0
      %2675 = vmatprep.subr.bf16.mxu0 0
      %2676 = vmatpush1.bf16.msra.mxu0 0
      %2677 = vmatprep.subr.bf16.mxu0 0
      %2678 = vmatpush1.bf16.msra.mxu0 0
      %2679 = vmatprep.mubr.bf16.mxu0 0
      %2680 = vmatmul.mubr.bf16.gmra.mrb[0].mxu0 %v2114
      %v2681 = vpop.f32.mrb[0].mxu0
      %v2682 = vadd.f32 0.0, %v2681
      %v2683 = vpop.f32.mrb[0].mxu0
      %v2684 = vpop.f32.mrb[0].mxu0
      %v2685 = vadd.f32 0.0, %v2684
      %v2686 = vpop.f32.mrb[0].mxu0
      %2687 = vdwg.mxu0
      %v2689 = vsel %vm1400, %v2103, 0
      %2691 = vmatprep.subr.bf16.mxu0 0
      %2692 = vmatpush1.bf16.msra.mxu0 %v2689
      %2693 = vmatprep.subr.bf16.mxu0 0
      %2694 = vmatpush1.bf16.msra.mxu0 0
      %2695 = vmatprep.subr.bf16.mxu0 0
      %2696 = vmatpush1.bf16.msra.mxu0 0
      %2697 = vmatprep.subr.bf16.mxu0 0
      %2698 = vmatpush1.bf16.msra.mxu0 0
      %2699 = vmatprep.subr.bf16.mxu0 0
      %2700 = vmatpush1.bf16.msra.mxu0 0
      %2701 = vmatprep.subr.bf16.mxu0 0
      %2702 = vmatpush1.bf16.msra.mxu0 0
      %2703 = vmatprep.subr.bf16.mxu0 0
      %2704 = vmatpush1.bf16.msra.mxu0 0
      %2705 = vmatprep.subr.bf16.mxu0 0
      %2706 = vmatpush1.bf16.msra.mxu0 0
      %2707 = vmatprep.subr.bf16.mxu0 0
      %2708 = vmatpush1.bf16.msra.mxu0 0
      %2709 = vmatprep.subr.bf16.mxu0 0
      %2710 = vmatpush1.bf16.msra.mxu0 0
      %2711 = vmatprep.subr.bf16.mxu0 0
      %2712 = vmatpush1.bf16.msra.mxu0 0
      %2713 = vmatprep.subr.bf16.mxu0 0
      %2714 = vmatpush1.bf16.msra.mxu0 0
      %2715 = vmatprep.subr.bf16.mxu0 0
      %2716 = vmatpush1.bf16.msra.mxu0 0
      %2717 = vmatprep.subr.bf16.mxu0 0
      %2718 = vmatpush1.bf16.msra.mxu0 0
      %2719 = vmatprep.subr.bf16.mxu0 0
      %2720 = vmatpush1.bf16.msra.mxu0 0
      %2721 = vmatprep.subr.bf16.mxu0 0
      %2722 = vmatpush1.bf16.msra.mxu0 0
      %2723 = vmatprep.mubr.bf16.mxu0 0
      %2724 = vmatmul.mubr.bf16.gmra.mrb[0].mxu0 %v2114
      %v2725 = vpop.f32.mrb[0].mxu0
      %v2726 = vadd.f32 0.0, %v2725
      %v2727 = vpop.f32.mrb[0].mxu0
      %v2728 = vpop.f32.mrb[0].mxu0
      %v2729 = vadd.f32 0.0, %v2728
      %v2730 = vpop.f32.mrb[0].mxu0
      %2731 = vdwg.mxu0
      %v2733 = vsel %vm1400, %v2104, 0
      %2735 = vmatprep.subr.bf16.mxu0 0
      %2736 = vmatpush1.bf16.msra.mxu0 %v2733
      %2737 = vmatprep.subr.bf16.mxu0 0
      %2738 = vmatpush1.bf16.msra.mxu0 0
      %2739 = vmatprep.subr.bf16.mxu0 0
      %2740 = vmatpush1.bf16.msra.mxu0 0
      %2741 = vmatprep.subr.bf16.mxu0 0
      %2742 = vmatpush1.bf16.msra.mxu0 0
      %2743 = vmatprep.subr.bf16.mxu0 0
      %2744 = vmatpush1.bf16.msra.mxu0 0
      %2745 = vmatprep.subr.bf16.mxu0 0
      %2746 = vmatpush1.bf16.msra.mxu0 0
      %2747 = vmatprep.subr.bf16.mxu0 0
      %2748 = vmatpush1.bf16.msra.mxu0 0
      %2749 = vmatprep.subr.bf16.mxu0 0
      %2750 = vmatpush1.bf16.msra.mxu0 0
      %2751 = vmatprep.subr.bf16.mxu0 0
      %2752 = vmatpush1.bf16.msra.mxu0 0
      %2753 = vmatprep.subr.bf16.mxu0 0
      %2754 = vmatpush1.bf16.msra.mxu0 0
      %2755 = vmatprep.subr.bf16.mxu0 0
      %2756 = vmatpush1.bf16.msra.mxu0 0
      %2757 = vmatprep.subr.bf16.mxu0 0
      %2758 = vmatpush1.bf16.msra.mxu0 0
      %2759 = vmatprep.subr.bf16.mxu0 0
      %2760 = vmatpush1.bf16.msra.mxu0 0
      %2761 = vmatprep.subr.bf16.mxu0 0
      %2762 = vmatpush1.bf16.msra.mxu0 0
      %2763 = vmatprep.subr.bf16.mxu0 0
      %2764 = vmatpush1.bf16.msra.mxu0 0
      %2765 = vmatprep.subr.bf16.mxu0 0
      %2766 = vmatpush1.bf16.msra.mxu0 0
      %2767 = vmatprep.mubr.bf16.mxu0 0
      %2768 = vmatmul.mubr.bf16.gmra.mrb[0].mxu0 %v2114
      %v2769 = vpop.f32.mrb[0].mxu0
      %v2770 = vadd.f32 0.0, %v2769
      %v2771 = vpop.f32.mrb[0].mxu0
      %v2772 = vpop.f32.mrb[0].mxu0
      %v2773 = vadd.f32 0.0, %v2772
      %v2774 = vpop.f32.mrb[0].mxu0
      %2775 = vdwg.mxu0
      %v2777 = vsel %vm1400, %v2105, 0
      %2779 = vmatprep.subr.bf16.mxu0 0
      %2780 = vmatpush1.bf16.msra.mxu0 %v2777
      %2781 = vmatprep.subr.bf16.mxu0 0
      %2782 = vmatpush1.bf16.msra.mxu0 0
      %2783 = vmatprep.subr.bf16.mxu0 0
      %2784 = vmatpush1.bf16.msra.mxu0 0
      %2785 = vmatprep.subr.bf16.mxu0 0
      %2786 = vmatpush1.bf16.msra.mxu0 0
      %2787 = vmatprep.subr.bf16.mxu0 0
      %2788 = vmatpush1.bf16.msra.mxu0 0
      %2789 = vmatprep.subr.bf16.mxu0 0
      %2790 = vmatpush1.bf16.msra.mxu0 0
      %2791 = vmatprep.subr.bf16.mxu0 0
      %2792 = vmatpush1.bf16.msra.mxu0 0
      %2793 = vmatprep.subr.bf16.mxu0 0
      %2794 = vmatpush1.bf16.msra.mxu0 0
      %2795 = vmatprep.subr.bf16.mxu0 0
      %2796 = vmatpush1.bf16.msra.mxu0 0
      %2797 = vmatprep.subr.bf16.mxu0 0
      %2798 = vmatpush1.bf16.msra.mxu0 0
      %2799 = vmatprep.subr.bf16.mxu0 0
      %2800 = vmatpush1.bf16.msra.mxu0 0
      %2801 = vmatprep.subr.bf16.mxu0 0
      %2802 = vmatpush1.bf16.msra.mxu0 0
      %2803 = vmatprep.subr.bf16.mxu0 0
      %2804 = vmatpush1.bf16.msra.mxu0 0
      %2805 = vmatprep.subr.bf16.mxu0 0
      %2806 = vmatpush1.bf16.msra.mxu0 0
      %2807 = vmatprep.subr.bf16.mxu0 0
      %2808 = vmatpush1.bf16.msra.mxu0 0
      %2809 = vmatprep.subr.bf16.mxu0 0
      %2810 = vmatpush1.bf16.msra.mxu0 0
      %2811 = vmatprep.mubr.bf16.mxu0 0
      %2812 = vmatmul.mubr.bf16.gmra.mrb[0].mxu0 %v2114
      %v2813 = vpop.f32.mrb[0].mxu0
      %v2814 = vadd.f32 0.0, %v2813
      %v2815 = vpop.f32.mrb[0].mxu0
      %v2816 = vpop.f32.mrb[0].mxu0
      %v2817 = vadd.f32 0.0, %v2816
      %v2818 = vpop.f32.mrb[0].mxu0
      %2819 = vdwg.mxu0
      %v2820 = vadd.f32 %v280, %v2154
      %v2821 = vadd.f32 %v281, %v2157
      %v2822 = vadd.f32 %v282, %v2198
      %v2823 = vadd.f32 %v283, %v2201
      %v2824 = vadd.f32 %v284, %v2242
      %v2825 = vadd.f32 %v285, %v2245
      %v2826 = vadd.f32 %v286, %v2286
      %v2827 = vadd.f32 %v287, %v2289
      %v2828 = vadd.f32 %v288, %v2330
      %v2829 = vadd.f32 %v289, %v2333
      %v2830 = vadd.f32 %v290, %v2374
      %v2831 = vadd.f32 %v291, %v2377
      %v2832 = vadd.f32 %v292, %v2418
      %v2833 = vadd.f32 %v293, %v2421
      %v2834 = vadd.f32 %v294, %v2462
      %v2835 = vadd.f32 %v295, %v2465
      %v2836 = vadd.f32 %v296, %v2506
      %v2837 = vadd.f32 %v297, %v2509
      %v2838 = vadd.f32 %v298, %v2550
      %v2839 = vadd.f32 %v299, %v2553
      %v2840 = vadd.f32 %v300, %v2594
      %v2841 = vadd.f32 %v301, %v2597
      %v2842 = vadd.f32 %v302, %v2638
      %v2843 = vadd.f32 %v303, %v2641
      %v2844 = vadd.f32 %v304, %v2682
      %v2845 = vadd.f32 %v305, %v2685
      %v2846 = vadd.f32 %v306, %v2726
      %v2847 = vadd.f32 %v307, %v2729
      %v2848 = vadd.f32 %v308, %v2770
      %v2849 = vadd.f32 %v309, %v2773
      %v2850 = vadd.f32 %v310, %v2814
      %v2851 = vadd.f32 %v311, %v2817
      %2852 = vst.msk [vmem:[%s278] sm:$0xff] %vm1396, %v2820
      %2853 = vst.msk [vmem:[%s278 + $0x8] sm:$0xff] %vm1396, %v2821
      %2854 = vst.msk [vmem:[%s278 + $0x10] sm:$0xff] %vm1396, %v2822
      %2855 = vst.msk [vmem:[%s278 + $0x18] sm:$0xff] %vm1396, %v2823
      %2856 = vst.msk [vmem:[%s278 + $0x20] sm:$0xff] %vm1396, %v2824
      %2857 = vst.msk [vmem:[%s278 + $0x28] sm:$0xff] %vm1396, %v2825
      %2858 = vst.msk [vmem:[%s278 + $0x30] sm:$0xff] %vm1396, %v2826
      %2859 = vst.msk [vmem:[%s278 + $0x38] sm:$0xff] %vm1396, %v2827
      %2860 = vst.msk [vmem:[%s278 + $0x40] sm:$0xff] %vm1396, %v2828
      %2861 = vst.msk [vmem:[%s278 + $0x48] sm:$0xff] %vm1396, %v2829
      %2862 = vst.msk [vmem:[%s278 + $0x50] sm:$0xff] %vm1396, %v2830
      %2863 = vst.msk [vmem:[%s278 + $0x58] sm:$0xff] %vm1396, %v2831
      %2864 = vst.msk [vmem:[%s278 + $0x60] sm:$0xff] %vm1396, %v2832
      %2865 = vst.msk [vmem:[%s278 + $0x68] sm:$0xff] %vm1396, %v2833
      %2866 = vst.msk [vmem:[%s278 + $0x70] sm:$0xff] %vm1396, %v2834
      %2867 = vst.msk [vmem:[%s278 + $0x78] sm:$0xff] %vm1396, %v2835
      %2868 = vst.msk [vmem:[%s278 + $0x80] sm:$0xff] %vm1396, %v2836
      %2869 = vst.msk [vmem:[%s278 + $0x88] sm:$0xff] %vm1396, %v2837
      %2870 = vst.msk [vmem:[%s278 + $0x90] sm:$0xff] %vm1396, %v2838
      %2871 = vst.msk [vmem:[%s278 + $0x98] sm:$0xff] %vm1396, %v2839
      %2872 = vst.msk [vmem:[%s278 + $0xa0] sm:$0xff] %vm1396, %v2840
      %2873 = vst.msk [vmem:[%s278 + $0xa8] sm:$0xff] %vm1396, %v2841
      %2874 = vst.msk [vmem:[%s278 + $0xb0] sm:$0xff] %vm1396, %v2842
      %2875 = vst.msk [vmem:[%s278 + $0xb8] sm:$0xff] %vm1396, %v2843
      %2876 = vst.msk [vmem:[%s278 + $0xc0] sm:$0xff] %vm1396, %v2844
      %2877 = vst.msk [vmem:[%s278 + $0xc8] sm:$0xff] %vm1396, %v2845
      %2878 = vst.msk [vmem:[%s278 + $0xd0] sm:$0xff] %vm1396, %v2846
      %2879 = vst.msk [vmem:[%s278 + $0xd8] sm:$0xff] %vm1396, %v2847
      %2880 = vst.msk [vmem:[%s278 + $0xe0] sm:$0xff] %vm1396, %v2848
      %2881 = vst.msk [vmem:[%s278 + $0xe8] sm:$0xff] %vm1396, %v2849
      %2882 = vst.msk [vmem:[%s278 + $0xf0] sm:$0xff] %vm1396, %v2850
      %2883 = vst.msk [vmem:[%s278 + $0xf8] sm:$0xff] %vm1396, %v2851
      %p2884 = scmp.lt.s32.totalorder %s18, 1
      %s2885 = scalar_select %p2884, %s18, 1
      %s2886 = smul.addr %s2885, 32
      %s2887 = smul.addr %s2886, 8
      %s2888 = scalar_lea.vmem %s7, %s2887
      // Predicated region
      $region49: #{nlb_forward.1} parent=47 // pred_check
        %p2889 = pneg %p188
      $region50: #{nlb_forward.1} parent=47 // pred_check_branch
        %2891 = sbr.rel (%p2889) target = $region52
      $region51: #{nlb_forward.1} parent=47 // pred_region
        _
      $region52: #{nlb_forward.1} parent=47 // pred_fallthru
        _
    $region48: #{nlb_forward.1} parent=5 // pred_fallthru
      _
    %p2892 = scmp.le.s32.totalorder 2, %s13
    // Predicated region
    $region53: #{nlb_forward.1} parent=5 // pred_check
      %p2893 = pneg %p2892
    $region54: #{nlb_forward.1} parent=5 // pred_check_branch
      %2895 = sbr.rel (%p2893) target = $region56
    $region55: #{nlb_forward.1} parent=5 // pred_region
      %s2896 = ssub.s32 %s13, 2
      // Predicated region
      $region57: #{nlb_forward.1} parent=55 // pred_check
        %p2897 = pneg %p194
      $region58: #{nlb_forward.1} parent=55 // pred_check_branch
        %2899 = sbr.rel (%p2897) target = $region60
      $region59: #{nlb_forward.1} parent=55 // pred_region
        %p2900 = scmp.lt.s32.totalorder %s19, 1
        %s2901 = scalar_select %p2900, %s19, 1
        %s2902 = smul.addr %s2901, 32
        %s2903 = smul.addr %s2902, 8
        %s2904 = scalar_lea.vmem %s7, %s2903
      $region60: #{nlb_forward.1} parent=55 // pred_fallthru
        _
    $region56: #{nlb_forward.1} parent=5 // pred_fallthru
      _
  $region6: #{nlb_forward.1} parent=0 // loop_footer
    %s17 = sadd.s32 1, %s13
  $region7: #{nlb_forward.1} parent=0 // loop_footer_branch
    %12 = sbr.rel target = $region3
  $region8: #{nlb_forward.1} parent=0 // loop_exit
    _

</llo_original>
